<compile_context>
chip_gen: v7x
topology: tpu7x:2x2x1
jax: 0.10.0
libtpu: 0.0.40
codegen_flags: <defaults>
</compile_context>

<pallas_src>
import numpy as np
import jax
import jax.numpy as jnp
from jax.experimental import pallas as pl
from jax.experimental.pallas import tpu as pltpu


# -----------------------------------------------------------------------------
# Host-side (one-time) parameter preparation.
# -----------------------------------------------------------------------------
def _banded_conv_weight(w_oihw, w_in):
    """(Cout, Cin, K, K) torch conv weight -> (K, w_in*Cin, w_in*Cout) banded matrix.

    Row index    : wi*Cin + ci                      (wi = unpadded input column)
    Column index : pw*(w_in//2)*Cout + w2*Cout + co (output column x = 2*w2 + pw)
    The W-direction 'same' padding is folded in by dropping out-of-range taps, and the
    (pw, w2, c) column order makes the 2x W-pool a max of the two column halves.
    """
    w = np.asarray(w_oihw, np.float32)
    c_out, c_in, K, _ = w.shape
    pad = (K - 1) // 2
    wh = w_in // 2
    big = np.zeros((K, w_in * c_in, w_in * c_out), np.float32)
    for kh in range(K):
        for pw in range(2):
            for w2 in range(wh):
                xcol = 2 * w2 + pw
                col0 = pw * wh * c_out + w2 * c_out
                for kw in range(K):
                    wi = xcol + kw - pad
                    if 0 <= wi < w_in:
                        big[kh, wi * c_in:(wi + 1) * c_in, col0:col0 + c_out] = \
                            w[:, :, kh, kw].T
    return big


def _prepare_params(params, space, K):
    """Build kernel-side operands (bf16 matmul weights, f32 biases, padded FC)."""
    n_classes = int(params["fc_b"].shape[0])
    n_out_pad = ((n_classes + 127) // 128) * 128      # lane-dense output (unmasked vst)
    conv_dims = []                                    # (H, W, Cin, Cout) input dims
    wargs = []
    H = W = space
    for (w, b) in params["conv"]:
        c_out, c_in = int(w.shape[0]), int(w.shape[1])
        conv_dims.append((H, W, c_in, c_out))
        wargs.append(jnp.asarray(_banded_conv_weight(w, W), jnp.bfloat16))
        bias_cols = np.tile(np.asarray(b, np.float32), W)[None, :]    # (1, W*Cout)
        wargs.append(jnp.asarray(bias_cols, jnp.float32))
        H //= 2
        W //= 2
    c_f = conv_dims[-1][3]
    # torch flattens (N, C, H, W); kernel activations are (H, W*C) -> permute fc weight,
    # and pad the class dim to a full 128-lane store.
    wf = np.asarray(params["fc_w"], np.float32).reshape(n_classes, c_f, H, W)
    wf = np.transpose(wf, (2, 3, 1, 0)).reshape(H, W * c_f, n_classes)
    wf = np.pad(wf, ((0, 0), (0, 0), (0, n_out_pad - n_classes)))
    wargs.append(jnp.asarray(wf, jnp.bfloat16))
    bfc = np.zeros((1, n_out_pad), np.float32)
    bfc[0, :n_classes] = np.asarray(params["fc_b"], np.float32)
    wargs.append(jnp.asarray(bfc, jnp.float32))
    return conv_dims, wargs, n_classes, n_out_pad


# -----------------------------------------------------------------------------
# Fused, batch-tiled kernel.
# -----------------------------------------------------------------------------
def _make_kernel(conv_dims, K, B_tile, n_out_pad):
    n_conv = len(conv_dims)
    pad = (K - 1) // 2
    f32, bf16 = jnp.float32, jnp.bfloat16

    def kernel(*refs):
        x_ref = refs[0]                        # (1, B_tile*(H0+2p), W0*Cin) f32, stacked+padded
        conv_refs = refs[1:1 + 2 * n_conv]
        wf_ref = refs[1 + 2 * n_conv]          # (Hf, Wf*Cf, n_out_pad) bf16
        bf_ref = refs[2 + 2 * n_conv]          # (1, n_out_pad) f32
        o_ref = refs[3 + 2 * n_conv]           # (1, B_tile, n_out_pad) f32
        scratch = refs[4 + 2 * n_conv:]

        si = 0
        # Layer-1 reads straight from the pipelined input block (already padded and
        # B_tile-stacked along the M axis by the wrapper).
        read_src = lambda kh, M: x_ref[0, pl.ds(kh, M), :]

        for li, (H, W, c_in, c_out) in enumerate(conv_dims):
            slot = H + 2 * pad                 # per-image row slot in this layer's input
            M = B_tile * slot - 2 * pad        # rows computed (incl. unused gap rows)
            w_ref = conv_refs[2 * li]
            b_ref = conv_refs[2 * li + 1]

            # K accumulating MXU matmuls over the whole B_tile-stacked slab
            # (bf16 operands, f32 accumulation); acc starts from the first tap.
            acc = jnp.dot(read_src(0, M).astype(bf16), w_ref[0],
                          preferred_element_type=f32)
            for kh in range(1, K):
                acc = acc + jnp.dot(read_src(kh, M).astype(bf16), w_ref[kh],
                                    preferred_element_type=f32)
            y = jnp.maximum(acc + b_ref[...], 0.0)          # bias + ReLU, one VPU pass

            # MaxPool2d(2), W direction: free lane-half max thanks to the banded
            # (pw, w2, c) output-column order.  Stage to VMEM for strided H-pool reads.
            half = (W // 2) * c_out
            s = scratch[si]; si += 1                        # (M, half) f32
            s[...] = jnp.maximum(y[:, :half], y[:, half:])

            if li + 1 < n_conv:
                # H-pool + restack into the next conv's zero-haloed per-image input.
                H2 = H // 2
                nslot = H2 + 2 * pad
                pin = scratch[si]; si += 1                  # (B_tile*nslot, half) f32
                for i in range(B_tile):
                    # Zero only the 2*pad halo rows each step (interior rows are fully
                    # overwritten below) -- safe under any megacore grid partitioning.
                    pin[pl.ds(i * nslot, pad), :] = jnp.zeros((pad, half), f32)
                    pin[pl.ds(i * nslot + pad + H2, pad), :] = jnp.zeros((pad, half), f32)
                    pin[pl.ds(i * nslot + pad, H2), :] = jnp.maximum(
                        s[pl.ds(i * slot, H2, stride=2), :],
                        s[pl.ds(i * slot + 1, H2, stride=2), :])
                read_src = (lambda kh, M, _p=pin: _p[pl.ds(kh, M), :])
            else:
                # Final layer: fuse the H-pool into the FC.  For pooled row h the
                # contributing rows of every image sit at stride `slot` in s, so two
                # strided reads give the (B_tile, half) operand of one batched
                # accumulating matmul against the NCHW-permuted, class-padded fc weight.
                H2 = H // 2
                fc = None
                for h in range(H2):
                    a_h = jnp.maximum(s[pl.ds(2 * h, B_tile, stride=slot), :],
                                      s[pl.ds(2 * h + 1, B_tile, stride=slot), :])
                    d = jnp.dot(a_h.astype(bf16), wf_ref[h],
                                preferred_element_type=f32)
                    fc = d if fc is None else fc + d
                # Lane-dense (B_tile, 128) store; padded class lanes sliced off outside.
                o_ref[0] = fc + bf_ref[...]

    return kernel


def build_cnn2d_forward(params, space, K, batch_tile=8):
    conv_dims, wargs, n_classes, n_out_pad = _prepare_params(params, space, K)
    pad = (K - 1) // 2
    B_tile = int(batch_tile)
    kernel = _make_kernel(conv_dims, K, B_tile, n_out_pad)
    H0, W0, cin0, _ = conv_dims[0]
    slot0 = H0 + 2 * pad

    in_specs = [pl.BlockSpec((1, B_tile * slot0, W0 * cin0), lambda g: (g, 0, 0))]
    for a in wargs:   # weights/biases: single full block, constant index_map (fetched once)
        in_specs.append(pl.BlockSpec(a.shape, lambda g, _nd=a.ndim: (0,) * _nd))

    scratch_shapes = []
    for li, (H, W, c_in, c_out) in enumerate(conv_dims):
        half = (W // 2) * c_out
        M = B_tile * (H + 2 * pad) - 2 * pad
        scratch_shapes.append(pltpu.VMEM((M, half), jnp.float32))            # pool stage
        if li + 1 < len(conv_dims):
            scratch_shapes.append(
                pltpu.VMEM((B_tile * (H // 2 + 2 * pad), half), jnp.float32))  # next input
    # NOTE: total VMEM footprint (scratch + double-buffered weights + blocks) is well
    # under 1 MiB at these shapes; set vmem_limit_bytes only if scaled up (v7x: 64 MiB).

    def forward(x_nchw):
        N, c_in, H, W = x_nchw.shape
        G = -(-N // B_tile)                               # ceil(N / B_tile)
        N_pad = G * B_tile
        x = jnp.transpose(x_nchw, (0, 2, 3, 1)).astype(jnp.float32)          # NHWC
        # batch tail pad (grid) + H 'same' pad; XLA fuses these with the transpose.
        x = jnp.pad(x, ((0, N_pad - N), (pad, pad), (0, 0), (0, 0)))
        # stack B_tile padded images along the matmul-M axis for each grid step
        x = x.reshape(G, B_tile * (H + 2 * pad), W * c_in)
        out = pl.pallas_call(
            kernel,
            out_shape=jax.ShapeDtypeStruct((G, B_tile, n_out_pad), jnp.float32),
            grid=(G,),
            in_specs=in_specs,
            out_specs=pl.BlockSpec((1, B_tile, n_out_pad), lambda g: (g, 0, 0)),
            scratch_shapes=scratch_shapes,
            compiler_params=pltpu.CompilerParams(
                dimension_semantics=("parallel",)),
        )(x, *wargs)
        return out.reshape(N_pad, n_out_pad)[:N, :n_classes]

    return jax.jit(forward)


# -----------------------------------------------------------------------------
# Pure-JAX reference (PyTorch semantics, HIGHEST precision).
# -----------------------------------------------------------------------------
def ref_forward(x_nchw, params):
    x = x_nchw.astype(jnp.float32)
    for w, b in params["conv"]:                             # w: (Cout, Cin, K, K)
        N, Cin, H, W = x.shape
        Cout, _, K, _ = w.shape
        pad = (K - 1) // 2
        xp = jnp.pad(x, ((0, 0), (0, 0), (pad, pad), (pad, pad)))
        cols = jnp.stack(
            [xp[:, :, kh:kh + H, kw:kw + W] for kh in range(K) for kw in range(K)],
            axis=2,
        )                                                   # (N, Cin, K*K, H, W)
        y = jnp.einsum(
            "nckhw,ock->nohw", cols, w.reshape(Cout, Cin, K * K),
            precision=jax.lax.Precision.HIGHEST,
        ) + b[None, :, None, None]
        y = jnp.maximum(y, 0.0)
        x = y.reshape(N, Cout, H // 2, 2, W // 2, 2).max(axis=(3, 5))
    flat = x.reshape(x.shape[0], -1)
    return (
        jnp.dot(flat, params["fc_w"].T, precision=jax.lax.Precision.HIGHEST)
        + params["fc_b"]
    )


if __name__ == "__main__":
    batch, in_ch, space = 6, 4, 16       # batch 6 with B_tile=4 -> grid=2 + tail padding
    hidden = [16, 16]
    n_classes = 10
    K = 5

    key = jax.random.PRNGKey(0)
    ks = jax.random.split(key, 7)
    # PyTorch parameter shapes: Conv2d -> (Cout, Cin, K, K) / (Cout,), Linear -> (out, in) / (out,)
    w1 = 0.10 * jax.random.normal(ks[0], (hidden[0], in_ch, K, K), jnp.float32)
    b1 = 0.10 * jax.random.normal(ks[1], (hidden[0],), jnp.float32)
    w2 = 0.05 * jax.random.normal(ks[2], (hidden[1], hidden[0], K, K), jnp.float32)
    b2 = 0.10 * jax.random.normal(ks[3], (hidden[1],), jnp.float32)
    feat = (space // 4) ** 2 * hidden[1]                    # 4 * 4 * 16 = 256
    wfc = 0.05 * jax.random.normal(ks[4], (n_classes, feat), jnp.float32)
    bfc = 0.10 * jax.random.normal(ks[5], (n_classes,), jnp.float32)
    params = {"conv": [(w1, b1), (w2, b2)], "fc_w": wfc, "fc_b": bfc}

    x = jax.random.normal(ks[6], (batch, in_ch, space, space), jnp.float32)

    forward = build_cnn2d_forward(params, space, K, batch_tile=4)
    out = jax.block_until_ready(forward(x))

    ref = ref_forward(x, params)
    assert out.shape == (batch, n_classes)
    # bf16 matmul operands (f32 accumulation) vs the f32 HIGHEST-precision reference.
    np.testing.assert_allclose(np.asarray(out), np.asarray(ref), rtol=2e-2, atol=2e-2)
    print("KERNEL_OK")
</pallas_src>

<mosaic_0001>
module attributes {stable_mosaic.version = 11 : i64} {
  func.func @kernel(%arg0: i32, %arg1: memref<1x80x64xf32, #tpu.memory_space<vmem>>, %arg2: memref<5x64x256xbf16, #tpu.memory_space<vmem>>, %arg3: memref<1x256xf32, #tpu.memory_space<vmem>>, %arg4: memref<5x128x128xbf16, #tpu.memory_space<vmem>>, %arg5: memref<1x128xf32, #tpu.memory_space<vmem>>, %arg6: memref<4x64x128xbf16, #tpu.memory_space<vmem>>, %arg7: memref<1x128xf32, #tpu.memory_space<vmem>>, %arg8: memref<1x4x128xf32, #tpu.memory_space<vmem>>, %arg9: memref<76x128xf32, #tpu.memory_space<vmem>>, %arg10: memref<48x128xf32, #tpu.memory_space<vmem>>, %arg11: memref<44x64xf32, #tpu.memory_space<vmem>>) attributes {dimension_semantics = [#tpu.dimension_semantics<parallel>], iteration_bounds = array<i64: 2>, scalar_prefetch = 0 : i64, scratch_operands = 3 : i64, tpu.core_type = #tpu.core_type<tc>, window_params = [{transform_indices = @transform_0, window_bounds = array<i64: 1, 80, 64>}, {pipeline_mode = #tpu.pipeline_mode<synchronous>, transform_indices = @transform_1, window_bounds = array<i64: 5, 64, 256>}, {pipeline_mode = #tpu.pipeline_mode<synchronous>, transform_indices = @transform_2, window_bounds = array<i64: 1, 256>}, {pipeline_mode = #tpu.pipeline_mode<synchronous>, transform_indices = @transform_3, window_bounds = array<i64: 5, 128, 128>}, {pipeline_mode = #tpu.pipeline_mode<synchronous>, transform_indices = @transform_4, window_bounds = array<i64: 1, 128>}, {pipeline_mode = #tpu.pipeline_mode<synchronous>, transform_indices = @transform_5, window_bounds = array<i64: 4, 64, 128>}, {pipeline_mode = #tpu.pipeline_mode<synchronous>, transform_indices = @transform_6, window_bounds = array<i64: 1, 128>}, {transform_indices = @transform_7, window_bounds = array<i64: 1, 4, 128>}]} {
    %c0 = arith.constant 0 : index
    %c0_0 = arith.constant 0 : index
    %c0_1 = arith.constant 0 : index
    %0 = vector.load %arg1[%c0, %c0_0, %c0_1] : memref<1x80x64xf32, #tpu.memory_space<vmem>>, vector<1x76x64xf32>
    %1 = vector.shape_cast %0 : vector<1x76x64xf32> to vector<76x64xf32>
    %2 = arith.truncf %1 : vector<76x64xf32> to vector<76x64xbf16>
    %c0_2 = arith.constant 0 : index
    %c0_3 = arith.constant 0 : index
    %c0_4 = arith.constant 0 : index
    %3 = vector.load %arg2[%c0_2, %c0_3, %c0_4] : memref<5x64x256xbf16, #tpu.memory_space<vmem>>, vector<1x64x256xbf16>
    %4 = vector.shape_cast %3 : vector<1x64x256xbf16> to vector<64x256xbf16>
    %cst = arith.constant dense<0.000000e+00> : vector<76x256xf32>
    %5 = tpu.matmul %2, %4, %cst {dimension_numbers = #tpu.dot_dimension_numbers<[1], [0], [0], [1], [0, 0, 1, 1], [], []>} : vector<76x64xbf16>, vector<64x256xbf16>, vector<76x256xf32> -> vector<76x256xf32>
    %c0_5 = arith.constant 0 : index
    %c1 = arith.constant 1 : index
    %c0_6 = arith.constant 0 : index
    %6 = vector.load %arg1[%c0_5, %c1, %c0_6] : memref<1x80x64xf32, #tpu.memory_space<vmem>>, vector<1x76x64xf32>
    %7 = vector.shape_cast %6 : vector<1x76x64xf32> to vector<76x64xf32>
    %8 = arith.truncf %7 : vector<76x64xf32> to vector<76x64xbf16>
    %c1_7 = arith.constant 1 : index
    %c0_8 = arith.constant 0 : index
    %c0_9 = arith.constant 0 : index
    %9 = vector.load %arg2[%c1_7, %c0_8, %c0_9] : memref<5x64x256xbf16, #tpu.memory_space<vmem>>, vector<1x64x256xbf16>
    %10 = vector.shape_cast %9 : vector<1x64x256xbf16> to vector<64x256xbf16>
    %cst_10 = arith.constant dense<0.000000e+00> : vector<76x256xf32>
    %11 = tpu.matmul %8, %10, %cst_10 {dimension_numbers = #tpu.dot_dimension_numbers<[1], [0], [0], [1], [0, 0, 1, 1], [], []>} : vector<76x64xbf16>, vector<64x256xbf16>, vector<76x256xf32> -> vector<76x256xf32>
    %12 = arith.addf %5, %11 : vector<76x256xf32>
    %c0_11 = arith.constant 0 : index
    %c2 = arith.constant 2 : index
    %c0_12 = arith.constant 0 : index
    %13 = vector.load %arg1[%c0_11, %c2, %c0_12] : memref<1x80x64xf32, #tpu.memory_space<vmem>>, vector<1x76x64xf32>
    %14 = vector.shape_cast %13 : vector<1x76x64xf32> to vector<76x64xf32>
    %15 = arith.truncf %14 : vector<76x64xf32> to vector<76x64xbf16>
    %c2_13 = arith.constant 2 : index
    %c0_14 = arith.constant 0 : index
    %c0_15 = arith.constant 0 : index
    %16 = vector.load %arg2[%c2_13, %c0_14, %c0_15] : memref<5x64x256xbf16, #tpu.memory_space<vmem>>, vector<1x64x256xbf16>
    %17 = vector.shape_cast %16 : vector<1x64x256xbf16> to vector<64x256xbf16>
    %cst_16 = arith.constant dense<0.000000e+00> : vector<76x256xf32>
    %18 = tpu.matmul %15, %17, %cst_16 {dimension_numbers = #tpu.dot_dimension_numbers<[1], [0], [0], [1], [0, 0, 1, 1], [], []>} : vector<76x64xbf16>, vector<64x256xbf16>, vector<76x256xf32> -> vector<76x256xf32>
    %19 = arith.addf %12, %18 : vector<76x256xf32>
    %c0_17 = arith.constant 0 : index
    %c3 = arith.constant 3 : index
    %c0_18 = arith.constant 0 : index
    %20 = vector.load %arg1[%c0_17, %c3, %c0_18] : memref<1x80x64xf32, #tpu.memory_space<vmem>>, vector<1x76x64xf32>
    %21 = vector.shape_cast %20 : vector<1x76x64xf32> to vector<76x64xf32>
    %22 = arith.truncf %21 : vector<76x64xf32> to vector<76x64xbf16>
    %c3_19 = arith.constant 3 : index
    %c0_20 = arith.constant 0 : index
    %c0_21 = arith.constant 0 : index
    %23 = vector.load %arg2[%c3_19, %c0_20, %c0_21] : memref<5x64x256xbf16, #tpu.memory_space<vmem>>, vector<1x64x256xbf16>
    %24 = vector.shape_cast %23 : vector<1x64x256xbf16> to vector<64x256xbf16>
    %cst_22 = arith.constant dense<0.000000e+00> : vector<76x256xf32>
    %25 = tpu.matmul %22, %24, %cst_22 {dimension_numbers = #tpu.dot_dimension_numbers<[1], [0], [0], [1], [0, 0, 1, 1], [], []>} : vector<76x64xbf16>, vector<64x256xbf16>, vector<76x256xf32> -> vector<76x256xf32>
    %26 = arith.addf %19, %25 : vector<76x256xf32>
    %c0_23 = arith.constant 0 : index
    %c4 = arith.constant 4 : index
    %c0_24 = arith.constant 0 : index
    %27 = vector.load %arg1[%c0_23, %c4, %c0_24] : memref<1x80x64xf32, #tpu.memory_space<vmem>>, vector<1x76x64xf32>
    %28 = vector.shape_cast %27 : vector<1x76x64xf32> to vector<76x64xf32>
    %29 = arith.truncf %28 : vector<76x64xf32> to vector<76x64xbf16>
    %c4_25 = arith.constant 4 : index
    %c0_26 = arith.constant 0 : index
    %c0_27 = arith.constant 0 : index
    %30 = vector.load %arg2[%c4_25, %c0_26, %c0_27] : memref<5x64x256xbf16, #tpu.memory_space<vmem>>, vector<1x64x256xbf16>
    %31 = vector.shape_cast %30 : vector<1x64x256xbf16> to vector<64x256xbf16>
    %cst_28 = arith.constant dense<0.000000e+00> : vector<76x256xf32>
    %32 = tpu.matmul %29, %31, %cst_28 {dimension_numbers = #tpu.dot_dimension_numbers<[1], [0], [0], [1], [0, 0, 1, 1], [], []>} : vector<76x64xbf16>, vector<64x256xbf16>, vector<76x256xf32> -> vector<76x256xf32>
    %33 = arith.addf %26, %32 : vector<76x256xf32>
    %c0_29 = arith.constant 0 : index
    %c0_30 = arith.constant 0 : index
    %34 = vector.load %arg3[%c0_29, %c0_30] : memref<1x256xf32, #tpu.memory_space<vmem>>, vector<1x256xf32>
    %35 = vector.broadcast %34 : vector<1x256xf32> to vector<76x256xf32>
    %36 = arith.addf %33, %35 : vector<76x256xf32>
    %cst_31 = arith.constant 0.000000e+00 : f32
    %37 = vector.broadcast %cst_31 : f32 to vector<76x256xf32>
    %38 = arith.maximumf %36, %37 : vector<76x256xf32>
    %39 = vector.extract_strided_slice %38 {offsets = [0, 0], sizes = [76, 128], strides = [1, 1]} : vector<76x256xf32> to vector<76x128xf32>
    %40 = vector.extract_strided_slice %38 {offsets = [0, 128], sizes = [76, 128], strides = [1, 1]} : vector<76x256xf32> to vector<76x128xf32>
    %41 = arith.maximumf %39, %40 : vector<76x128xf32>
    %c0_32 = arith.constant 0 : index
    %c0_33 = arith.constant 0 : index
    %42 = vector.load %arg9[%c0_32, %c0_33] : memref<76x128xf32, #tpu.memory_space<vmem>>, vector<76x128xf32>
    tpu.vector_store %arg9[%c0_32, %c0_33], %41 {strides = array<i32>} : memref<76x128xf32, #tpu.memory_space<vmem>>, vector<76x128xf32>,
    %cst_34 = arith.constant 0.000000e+00 : f32
    %43 = vector.broadcast %cst_34 : f32 to vector<2x128xf32>
    %c0_35 = arith.constant 0 : index
    %c0_36 = arith.constant 0 : index
    %44 = vector.load %arg10[%c0_35, %c0_36] : memref<48x128xf32, #tpu.memory_space<vmem>>, vector<2x128xf32>
    tpu.vector_store %arg10[%c0_35, %c0_36], %43 {strides = array<i32>} : memref<48x128xf32, #tpu.memory_space<vmem>>, vector<2x128xf32>,
    %cst_37 = arith.constant 0.000000e+00 : f32
    %45 = vector.broadcast %cst_37 : f32 to vector<2x128xf32>
    %c10 = arith.constant 10 : index
    %c0_38 = arith.constant 0 : index
    %46 = vector.load %arg10[%c10, %c0_38] : memref<48x128xf32, #tpu.memory_space<vmem>>, vector<2x128xf32>
    tpu.vector_store %arg10[%c10, %c0_38], %45 {strides = array<i32>} : memref<48x128xf32, #tpu.memory_space<vmem>>, vector<2x128xf32>,
    %c0_39 = arith.constant 0 : index
    %c0_40 = arith.constant 0 : index
    %47 = tpu.strided_load %arg9[%c0_39, %c0_40] {strides = array<i32: 2, 1>} : memref<76x128xf32, #tpu.memory_space<vmem>>, vector<8x128xf32>
    %c1_41 = arith.constant 1 : index
    %c0_42 = arith.constant 0 : index
    %48 = tpu.strided_load %arg9[%c1_41, %c0_42] {strides = array<i32: 2, 1>} : memref<76x128xf32, #tpu.memory_space<vmem>>, vector<8x128xf32>
    %49 = arith.maximumf %47, %48 : vector<8x128xf32>
    %c2_43 = arith.constant 2 : index
    %c0_44 = arith.constant 0 : index
    %50 = vector.load %arg10[%c2_43, %c0_44] : memref<48x128xf32, #tpu.memory_space<vmem>>, vector<8x128xf32>
    tpu.vector_store %arg10[%c2_43, %c0_44], %49 {strides = array<i32>} : memref<48x128xf32, #tpu.memory_space<vmem>>, vector<8x128xf32>,
    %cst_45 = arith.constant 0.000000e+00 : f32
    %51 = vector.broadcast %cst_45 : f32 to vector<2x128xf32>
    %c12 = arith.constant 12 : index
    %c0_46 = arith.constant 0 : index
    %52 = vector.load %arg10[%c12, %c0_46] : memref<48x128xf32, #tpu.memory_space<vmem>>, vector<2x128xf32>
    tpu.vector_store %arg10[%c12, %c0_46], %51 {strides = array<i32>} : memref<48x128xf32, #tpu.memory_space<vmem>>, vector<2x128xf32>,
    %cst_47 = arith.constant 0.000000e+00 : f32
    %53 = vector.broadcast %cst_47 : f32 to vector<2x128xf32>
    %c22 = arith.constant 22 : index
    %c0_48 = arith.constant 0 : index
    %54 = vector.load %arg10[%c22, %c0_48] : memref<48x128xf32, #tpu.memory_space<vmem>>, vector<2x128xf32>
    tpu.vector_store %arg10[%c22, %c0_48], %53 {strides = array<i32>} : memref<48x128xf32, #tpu.memory_space<vmem>>, vector<2x128xf32>,
    %c20 = arith.constant 20 : index
    %c0_49 = arith.constant 0 : index
    %55 = tpu.strided_load %arg9[%c20, %c0_49] {strides = array<i32: 2, 1>} : memref<76x128xf32, #tpu.memory_space<vmem>>, vector<8x128xf32>
    %c21 = arith.constant 21 : index
    %c0_50 = arith.constant 0 : index
    %56 = tpu.strided_load %arg9[%c21, %c0_50] {strides = array<i32: 2, 1>} : memref<76x128xf32, #tpu.memory_space<vmem>>, vector<8x128xf32>
    %57 = arith.maximumf %55, %56 : vector<8x128xf32>
    %c14 = arith.constant 14 : index
    %c0_51 = arith.constant 0 : index
    %58 = vector.load %arg10[%c14, %c0_51] : memref<48x128xf32, #tpu.memory_space<vmem>>, vector<8x128xf32>
    tpu.vector_store %arg10[%c14, %c0_51], %57 {strides = array<i32>} : memref<48x128xf32, #tpu.memory_space<vmem>>, vector<8x128xf32>,
    %cst_52 = arith.constant 0.000000e+00 : f32
    %59 = vector.broadcast %cst_52 : f32 to vector<2x128xf32>
    %c24 = arith.constant 24 : index
    %c0_53 = arith.constant 0 : index
    %60 = vector.load %arg10[%c24, %c0_53] : memref<48x128xf32, #tpu.memory_space<vmem>>, vector<2x128xf32>
    tpu.vector_store %arg10[%c24, %c0_53], %59 {strides = array<i32>} : memref<48x128xf32, #tpu.memory_space<vmem>>, vector<2x128xf32>,
    %cst_54 = arith.constant 0.000000e+00 : f32
    %61 = vector.broadcast %cst_54 : f32 to vector<2x128xf32>
    %c34 = arith.constant 34 : index
    %c0_55 = arith.constant 0 : index
    %62 = vector.load %arg10[%c34, %c0_55] : memref<48x128xf32, #tpu.memory_space<vmem>>, vector<2x128xf32>
    tpu.vector_store %arg10[%c34, %c0_55], %61 {strides = array<i32>} : memref<48x128xf32, #tpu.memory_space<vmem>>, vector<2x128xf32>,
    %c40 = arith.constant 40 : index
    %c0_56 = arith.constant 0 : index
    %63 = tpu.strided_load %arg9[%c40, %c0_56] {strides = array<i32: 2, 1>} : memref<76x128xf32, #tpu.memory_space<vmem>>, vector<8x128xf32>
    %c41 = arith.constant 41 : index
    %c0_57 = arith.constant 0 : index
    %64 = tpu.strided_load %arg9[%c41, %c0_57] {strides = array<i32: 2, 1>} : memref<76x128xf32, #tpu.memory_space<vmem>>, vector<8x128xf32>
    %65 = arith.maximumf %63, %64 : vector<8x128xf32>
    %c26 = arith.constant 26 : index
    %c0_58 = arith.constant 0 : index
    %66 = vector.load %arg10[%c26, %c0_58] : memref<48x128xf32, #tpu.memory_space<vmem>>, vector<8x128xf32>
    tpu.vector_store %arg10[%c26, %c0_58], %65 {strides = array<i32>} : memref<48x128xf32, #tpu.memory_space<vmem>>, vector<8x128xf32>,
    %cst_59 = arith.constant 0.000000e+00 : f32
    %67 = vector.broadcast %cst_59 : f32 to vector<2x128xf32>
    %c36 = arith.constant 36 : index
    %c0_60 = arith.constant 0 : index
    %68 = vector.load %arg10[%c36, %c0_60] : memref<48x128xf32, #tpu.memory_space<vmem>>, vector<2x128xf32>
    tpu.vector_store %arg10[%c36, %c0_60], %67 {strides = array<i32>} : memref<48x128xf32, #tpu.memory_space<vmem>>, vector<2x128xf32>,
    %cst_61 = arith.constant 0.000000e+00 : f32
    %69 = vector.broadcast %cst_61 : f32 to vector<2x128xf32>
    %c46 = arith.constant 46 : index
    %c0_62 = arith.constant 0 : index
    %70 = vector.load %arg10[%c46, %c0_62] : memref<48x128xf32, #tpu.memory_space<vmem>>, vector<2x128xf32>
    tpu.vector_store %arg10[%c46, %c0_62], %69 {strides = array<i32>} : memref<48x128xf32, #tpu.memory_space<vmem>>, vector<2x128xf32>,
    %c60 = arith.constant 60 : index
    %c0_63 = arith.constant 0 : index
    %71 = tpu.strided_load %arg9[%c60, %c0_63] {strides = array<i32: 2, 1>} : memref<76x128xf32, #tpu.memory_space<vmem>>, vector<8x128xf32>
    %c61 = arith.constant 61 : index
    %c0_64 = arith.constant 0 : index
    %72 = tpu.strided_load %arg9[%c61, %c0_64] {strides = array<i32: 2, 1>} : memref<76x128xf32, #tpu.memory_space<vmem>>, vector<8x128xf32>
    %73 = arith.maximumf %71, %72 : vector<8x128xf32>
    %c38 = arith.constant 38 : index
    %c0_65 = arith.constant 0 : index
    %74 = vector.load %arg10[%c38, %c0_65] : memref<48x128xf32, #tpu.memory_space<vmem>>, vector<8x128xf32>
    tpu.vector_store %arg10[%c38, %c0_65], %73 {strides = array<i32>} : memref<48x128xf32, #tpu.memory_space<vmem>>, vector<8x128xf32>,
    %c0_66 = arith.constant 0 : index
    %c0_67 = arith.constant 0 : index
    %75 = vector.load %arg10[%c0_66, %c0_67] : memref<48x128xf32, #tpu.memory_space<vmem>>, vector<44x128xf32>
    %76 = arith.truncf %75 : vector<44x128xf32> to vector<44x128xbf16>
    %c0_68 = arith.constant 0 : index
    %c0_69 = arith.constant 0 : index
    %c0_70 = arith.constant 0 : index
    %77 = vector.load %arg4[%c0_68, %c0_69, %c0_70] : memref<5x128x128xbf16, #tpu.memory_space<vmem>>, vector<1x128x128xbf16>
    %78 = vector.shape_cast %77 : vector<1x128x128xbf16> to vector<128x128xbf16>
    %cst_71 = arith.constant dense<0.000000e+00> : vector<44x128xf32>
    %79 = tpu.matmul %76, %78, %cst_71 {dimension_numbers = #tpu.dot_dimension_numbers<[1], [0], [0], [1], [0, 0, 1, 1], [], []>} : vector<44x128xbf16>, vector<128x128xbf16>, vector<44x128xf32> -> vector<44x128xf32>
    %c1_72 = arith.constant 1 : index
    %c0_73 = arith.constant 0 : index
    %80 = vector.load %arg10[%c1_72, %c0_73] : memref<48x128xf32, #tpu.memory_space<vmem>>, vector<44x128xf32>
    %81 = arith.truncf %80 : vector<44x128xf32> to vector<44x128xbf16>
    %c1_74 = arith.constant 1 : index
    %c0_75 = arith.constant 0 : index
    %c0_76 = arith.constant 0 : index
    %82 = vector.load %arg4[%c1_74, %c0_75, %c0_76] : memref<5x128x128xbf16, #tpu.memory_space<vmem>>, vector<1x128x128xbf16>
    %83 = vector.shape_cast %82 : vector<1x128x128xbf16> to vector<128x128xbf16>
    %cst_77 = arith.constant dense<0.000000e+00> : vector<44x128xf32>
    %84 = tpu.matmul %81, %83, %cst_77 {dimension_numbers = #tpu.dot_dimension_numbers<[1], [0], [0], [1], [0, 0, 1, 1], [], []>} : vector<44x128xbf16>, vector<128x128xbf16>, vector<44x128xf32> -> vector<44x128xf32>
    %85 = arith.addf %79, %84 : vector<44x128xf32>
    %c2_78 = arith.constant 2 : index
    %c0_79 = arith.constant 0 : index
    %86 = vector.load %arg10[%c2_78, %c0_79] : memref<48x128xf32, #tpu.memory_space<vmem>>, vector<44x128xf32>
    %87 = arith.truncf %86 : vector<44x128xf32> to vector<44x128xbf16>
    %c2_80 = arith.constant 2 : index
    %c0_81 = arith.constant 0 : index
    %c0_82 = arith.constant 0 : index
    %88 = vector.load %arg4[%c2_80, %c0_81, %c0_82] : memref<5x128x128xbf16, #tpu.memory_space<vmem>>, vector<1x128x128xbf16>
    %89 = vector.shape_cast %88 : vector<1x128x128xbf16> to vector<128x128xbf16>
    %cst_83 = arith.constant dense<0.000000e+00> : vector<44x128xf32>
    %90 = tpu.matmul %87, %89, %cst_83 {dimension_numbers = #tpu.dot_dimension_numbers<[1], [0], [0], [1], [0, 0, 1, 1], [], []>} : vector<44x128xbf16>, vector<128x128xbf16>, vector<44x128xf32> -> vector<44x128xf32>
    %91 = arith.addf %85, %90 : vector<44x128xf32>
    %c3_84 = arith.constant 3 : index
    %c0_85 = arith.constant 0 : index
    %92 = vector.load %arg10[%c3_84, %c0_85] : memref<48x128xf32, #tpu.memory_space<vmem>>, vector<44x128xf32>
    %93 = arith.truncf %92 : vector<44x128xf32> to vector<44x128xbf16>
    %c3_86 = arith.constant 3 : index
    %c0_87 = arith.constant 0 : index
    %c0_88 = arith.constant 0 : index
    %94 = vector.load %arg4[%c3_86, %c0_87, %c0_88] : memref<5x128x128xbf16, #tpu.memory_space<vmem>>, vector<1x128x128xbf16>
    %95 = vector.shape_cast %94 : vector<1x128x128xbf16> to vector<128x128xbf16>
    %cst_89 = arith.constant dense<0.000000e+00> : vector<44x128xf32>
    %96 = tpu.matmul %93, %95, %cst_89 {dimension_numbers = #tpu.dot_dimension_numbers<[1], [0], [0], [1], [0, 0, 1, 1], [], []>} : vector<44x128xbf16>, vector<128x128xbf16>, vector<44x128xf32> -> vector<44x128xf32>
    %97 = arith.addf %91, %96 : vector<44x128xf32>
    %c4_90 = arith.constant 4 : index
    %c0_91 = arith.constant 0 : index
    %98 = vector.load %arg10[%c4_90, %c0_91] : memref<48x128xf32, #tpu.memory_space<vmem>>, vector<44x128xf32>
    %99 = arith.truncf %98 : vector<44x128xf32> to vector<44x128xbf16>
    %c4_92 = arith.constant 4 : index
    %c0_93 = arith.constant 0 : index
    %c0_94 = arith.constant 0 : index
    %100 = vector.load %arg4[%c4_92, %c0_93, %c0_94] : memref<5x128x128xbf16, #tpu.memory_space<vmem>>, vector<1x128x128xbf16>
    %101 = vector.shape_cast %100 : vector<1x128x128xbf16> to vector<128x128xbf16>
    %cst_95 = arith.constant dense<0.000000e+00> : vector<44x128xf32>
    %102 = tpu.matmul %99, %101, %cst_95 {dimension_numbers = #tpu.dot_dimension_numbers<[1], [0], [0], [1], [0, 0, 1, 1], [], []>} : vector<44x128xbf16>, vector<128x128xbf16>, vector<44x128xf32> -> vector<44x128xf32>
    %103 = arith.addf %97, %102 : vector<44x128xf32>
    %c0_96 = arith.constant 0 : index
    %c0_97 = arith.constant 0 : index
    %104 = vector.load %arg5[%c0_96, %c0_97] : memref<1x128xf32, #tpu.memory_space<vmem>>, vector<1x128xf32>
    %105 = vector.broadcast %104 : vector<1x128xf32> to vector<44x128xf32>
    %106 = arith.addf %103, %105 : vector<44x128xf32>
    %cst_98 = arith.constant 0.000000e+00 : f32
    %107 = vector.broadcast %cst_98 : f32 to vector<44x128xf32>
    %108 = arith.maximumf %106, %107 : vector<44x128xf32>
    %109 = vector.extract_strided_slice %108 {offsets = [0, 0], sizes = [44, 64], strides = [1, 1]} : vector<44x128xf32> to vector<44x64xf32>
    %110 = vector.extract_strided_slice %108 {offsets = [0, 64], sizes = [44, 64], strides = [1, 1]} : vector<44x128xf32> to vector<44x64xf32>
    %111 = arith.maximumf %109, %110 : vector<44x64xf32>
    %c0_99 = arith.constant 0 : index
    %c0_100 = arith.constant 0 : index
    %112 = vector.load %arg11[%c0_99, %c0_100] : memref<44x64xf32, #tpu.memory_space<vmem>>, vector<44x64xf32>
    tpu.vector_store %arg11[%c0_99, %c0_100], %111 {strides = array<i32>} : memref<44x64xf32, #tpu.memory_space<vmem>>, vector<44x64xf32>,
    %c0_101 = arith.constant 0 : index
    %c0_102 = arith.constant 0 : index
    %113 = tpu.strided_load %arg11[%c0_101, %c0_102] {strides = array<i32: 12, 1>} : memref<44x64xf32, #tpu.memory_space<vmem>>, vector<4x64xf32>
    %c1_103 = arith.constant 1 : index
    %c0_104 = arith.constant 0 : index
    %114 = tpu.strided_load %arg11[%c1_103, %c0_104] {strides = array<i32: 12, 1>} : memref<44x64xf32, #tpu.memory_space<vmem>>, vector<4x64xf32>
    %115 = arith.maximumf %113, %114 : vector<4x64xf32>
    %116 = arith.truncf %115 : vector<4x64xf32> to vector<4x64xbf16>
    %c0_105 = arith.constant 0 : index
    %c0_106 = arith.constant 0 : index
    %c0_107 = arith.constant 0 : index
    %117 = vector.load %arg6[%c0_105, %c0_106, %c0_107] : memref<4x64x128xbf16, #tpu.memory_space<vmem>>, vector<1x64x128xbf16>
    %118 = vector.shape_cast %117 : vector<1x64x128xbf16> to vector<64x128xbf16>
    %cst_108 = arith.constant dense<0.000000e+00> : vector<4x128xf32>
    %119 = tpu.matmul %116, %118, %cst_108 {dimension_numbers = #tpu.dot_dimension_numbers<[1], [0], [0], [1], [0, 0, 1, 1], [], []>} : vector<4x64xbf16>, vector<64x128xbf16>, vector<4x128xf32> -> vector<4x128xf32>
    %c2_109 = arith.constant 2 : index
    %c0_110 = arith.constant 0 : index
    %120 = tpu.strided_load %arg11[%c2_109, %c0_110] {strides = array<i32: 12, 1>} : memref<44x64xf32, #tpu.memory_space<vmem>>, vector<4x64xf32>
    %c3_111 = arith.constant 3 : index
    %c0_112 = arith.constant 0 : index
    %121 = tpu.strided_load %arg11[%c3_111, %c0_112] {strides = array<i32: 12, 1>} : memref<44x64xf32, #tpu.memory_space<vmem>>, vector<4x64xf32>
    %122 = arith.maximumf %120, %121 : vector<4x64xf32>
    %123 = arith.truncf %122 : vector<4x64xf32> to vector<4x64xbf16>
    %c1_113 = arith.constant 1 : index
    %c0_114 = arith.constant 0 : index
    %c0_115 = arith.constant 0 : index
    %124 = vector.load %arg6[%c1_113, %c0_114, %c0_115] : memref<4x64x128xbf16, #tpu.memory_space<vmem>>, vector<1x64x128xbf16>
    %125 = vector.shape_cast %124 : vector<1x64x128xbf16> to vector<64x128xbf16>
    %cst_116 = arith.constant dense<0.000000e+00> : vector<4x128xf32>
    %126 = tpu.matmul %123, %125, %cst_116 {dimension_numbers = #tpu.dot_dimension_numbers<[1], [0], [0], [1], [0, 0, 1, 1], [], []>} : vector<4x64xbf16>, vector<64x128xbf16>, vector<4x128xf32> -> vector<4x128xf32>
    %127 = arith.addf %119, %126 : vector<4x128xf32>
    %c4_117 = arith.constant 4 : index
    %c0_118 = arith.constant 0 : index
    %128 = tpu.strided_load %arg11[%c4_117, %c0_118] {strides = array<i32: 12, 1>} : memref<44x64xf32, #tpu.memory_space<vmem>>, vector<4x64xf32>
    %c5 = arith.constant 5 : index
    %c0_119 = arith.constant 0 : index
    %129 = tpu.strided_load %arg11[%c5, %c0_119] {strides = array<i32: 12, 1>} : memref<44x64xf32, #tpu.memory_space<vmem>>, vector<4x64xf32>
    %130 = arith.maximumf %128, %129 : vector<4x64xf32>
    %131 = arith.truncf %130 : vector<4x64xf32> to vector<4x64xbf16>
    %c2_120 = arith.constant 2 : index
    %c0_121 = arith.constant 0 : index
    %c0_122 = arith.constant 0 : index
    %132 = vector.load %arg6[%c2_120, %c0_121, %c0_122] : memref<4x64x128xbf16, #tpu.memory_space<vmem>>, vector<1x64x128xbf16>
    %133 = vector.shape_cast %132 : vector<1x64x128xbf16> to vector<64x128xbf16>
    %cst_123 = arith.constant dense<0.000000e+00> : vector<4x128xf32>
    %134 = tpu.matmul %131, %133, %cst_123 {dimension_numbers = #tpu.dot_dimension_numbers<[1], [0], [0], [1], [0, 0, 1, 1], [], []>} : vector<4x64xbf16>, vector<64x128xbf16>, vector<4x128xf32> -> vector<4x128xf32>
    %135 = arith.addf %127, %134 : vector<4x128xf32>
    %c6 = arith.constant 6 : index
    %c0_124 = arith.constant 0 : index
    %136 = tpu.strided_load %arg11[%c6, %c0_124] {strides = array<i32: 12, 1>} : memref<44x64xf32, #tpu.memory_space<vmem>>, vector<4x64xf32>
    %c7 = arith.constant 7 : index
    %c0_125 = arith.constant 0 : index
    %137 = tpu.strided_load %arg11[%c7, %c0_125] {strides = array<i32: 12, 1>} : memref<44x64xf32, #tpu.memory_space<vmem>>, vector<4x64xf32>
    %138 = arith.maximumf %136, %137 : vector<4x64xf32>
    %139 = arith.truncf %138 : vector<4x64xf32> to vector<4x64xbf16>
    %c3_126 = arith.constant 3 : index
    %c0_127 = arith.constant 0 : index
    %c0_128 = arith.constant 0 : index
    %140 = vector.load %arg6[%c3_126, %c0_127, %c0_128] : memref<4x64x128xbf16, #tpu.memory_space<vmem>>, vector<1x64x128xbf16>
    %141 = vector.shape_cast %140 : vector<1x64x128xbf16> to vector<64x128xbf16>
    %cst_129 = arith.constant dense<0.000000e+00> : vector<4x128xf32>
    %142 = tpu.matmul %139, %141, %cst_129 {dimension_numbers = #tpu.dot_dimension_numbers<[1], [0], [0], [1], [0, 0, 1, 1], [], []>} : vector<4x64xbf16>, vector<64x128xbf16>, vector<4x128xf32> -> vector<4x128xf32>
    %143 = arith.addf %135, %142 : vector<4x128xf32>
    %c0_130 = arith.constant 0 : index
    %c0_131 = arith.constant 0 : index
    %144 = vector.load %arg7[%c0_130, %c0_131] : memref<1x128xf32, #tpu.memory_space<vmem>>, vector<1x128xf32>
    %145 = vector.broadcast %144 : vector<1x128xf32> to vector<4x128xf32>
    %146 = arith.addf %143, %145 : vector<4x128xf32>
    %c0_132 = arith.constant 0 : index
    %c0_133 = arith.constant 0 : index
    %c0_134 = arith.constant 0 : index
    %147 = vector.load %arg8[%c0_132, %c0_133, %c0_134] : memref<1x4x128xf32, #tpu.memory_space<vmem>>, vector<1x4x128xf32>
    %148 = vector.shape_cast %147 : vector<1x4x128xf32> to vector<4x128xf32>
    %149 = vector.shape_cast %146 : vector<4x128xf32> to vector<1x4x128xf32>
    tpu.vector_store %arg8[%c0_132, %c0_133, %c0_134], %149 {strides = array<i32>} : memref<1x4x128xf32, #tpu.memory_space<vmem>>, vector<1x4x128xf32>,
    return
  }
  func.func @transform_0(%arg0: i32) -> (i32, i32, i32) {
    %c0_i32 = arith.constant 0 : i32
    %c0_i32_0 = arith.constant 0 : i32
    %c0_i32_1 = arith.constant 0 : i32
    return %arg0, %c0_i32, %c0_i32_0 : i32, i32, i32
  }
  func.func @transform_1(%arg0: i32) -> (i32, i32, i32) {
    %c0_i32 = arith.constant 0 : i32
    %c0_i32_0 = arith.constant 0 : i32
    %c0_i32_1 = arith.constant 0 : i32
    %c0_i32_2 = arith.constant 0 : i32
    return %c0_i32, %c0_i32_0, %c0_i32_1 : i32, i32, i32
  }
  func.func @transform_2(%arg0: i32) -> (i32, i32) {
    %c0_i32 = arith.constant 0 : i32
    %c0_i32_0 = arith.constant 0 : i32
    %c0_i32_1 = arith.constant 0 : i32
    return %c0_i32, %c0_i32_0 : i32, i32
  }
  func.func @transform_3(%arg0: i32) -> (i32, i32, i32) {
    %c0_i32 = arith.constant 0 : i32
    %c0_i32_0 = arith.constant 0 : i32
    %c0_i32_1 = arith.constant 0 : i32
    %c0_i32_2 = arith.constant 0 : i32
    return %c0_i32, %c0_i32_0, %c0_i32_1 : i32, i32, i32
  }
  func.func @transform_4(%arg0: i32) -> (i32, i32) {
    %c0_i32 = arith.constant 0 : i32
    %c0_i32_0 = arith.constant 0 : i32
    %c0_i32_1 = arith.constant 0 : i32
    return %c0_i32, %c0_i32_0 : i32, i32
  }
  func.func @transform_5(%arg0: i32) -> (i32, i32, i32) {
    %c0_i32 = arith.constant 0 : i32
    %c0_i32_0 = arith.constant 0 : i32
    %c0_i32_1 = arith.constant 0 : i32
    %c0_i32_2 = arith.constant 0 : i32
    return %c0_i32, %c0_i32_0, %c0_i32_1 : i32, i32, i32
  }
  func.func @transform_6(%arg0: i32) -> (i32, i32) {
    %c0_i32 = arith.constant 0 : i32
    %c0_i32_0 = arith.constant 0 : i32
    %c0_i32_1 = arith.constant 0 : i32
    return %c0_i32, %c0_i32_0 : i32, i32
  }
  func.func @transform_7(%arg0: i32) -> (i32, i32, i32) {
    %c0_i32 = arith.constant 0 : i32
    %c0_i32_0 = arith.constant 0 : i32
    %c0_i32_1 = arith.constant 0 : i32
    return %arg0, %c0_i32, %c0_i32_0 : i32, i32, i32
  }
}

</mosaic_0001>

<llo_original>
// kernel: forward.1
$region0: #{forward.1}
  #allocation0 [shape = 'u32[]', space=smem, size = 0x4, offset = 0x4, fixed_abs, tag = 'smem constant byte address 0x4 - core index']
  #allocation1 [shape = 'u32[144,128]{1,0:T(1,128)}', space=vmem, size = 0x12000, scoped, tag = 'internal scratch']
  #allocation2 [shape = 'f32[76,128]{1,0:T(8,128)}', space=vmem, size = 0xa000, scoped, tag = 'scratch operand']
  #allocation3 [shape = 'f32[48,128]{1,0:T(8,128)}', space=vmem, size = 0x6000, scoped, tag = 'scratch operand']
  #allocation4 [shape = 'f32[44,64]{1,0:T(8,128)}', space=vmem, size = 0x6000, scoped, tag = 'scratch operand']
  %s0 = inlined_call_operand.vmem [shape: f32[2,80,64], index: 0, kind: input, shape index: {}]
  %s1 = inlined_call_operand.vmem [shape: bf16[5,64,256], index: 1, kind: input, shape index: {}]
  %s2 = inlined_call_operand.vmem [shape: f32[1,256], index: 2, kind: input, shape index: {}]
  %s3 = inlined_call_operand.vmem [shape: bf16[5,128,128], index: 3, kind: input, shape index: {}]
  %s4 = inlined_call_operand.vmem [shape: f32[1,128], index: 4, kind: input, shape index: {}]
  %s5 = inlined_call_operand.vmem [shape: bf16[4,64,128], index: 5, kind: input, shape index: {}]
  %s6 = inlined_call_operand.vmem [shape: f32[1,128], index: 6, kind: input, shape index: {}]
  %s7 = inlined_call_operand.hbm [shape: f32[2,4,128], index: 7, kind: output, shape index: {}]
  %s8 = sld [smem:[#allocation0]]
  $region61: #{forward.1} parent=0
    _
  %s10 = ssub.s32 1, %s8
  %s11 = scalar_select 0, %s10, %s8
  $region1: #{forward.1} parent=0
    #allocation5 [shape = 'u8[4096]{0}', space=vmem, size = 0x1000, scoped, tag = 'output window, operand 0']
    #allocation6 [shape = 's32[2]{0}', space=sflag, size = 0x8, scoped, tag = 'scoped memory for forward.1']
    %12 = vsyncpa [#allocation6], 0
    %s13 = scalar_lea.sflag [#allocation6], 1
    %14 = vsyncpa %s13, 0
    loop: start=0, step=1, limit=4
    $region2: #{forward.1} parent=1 // loop_pre_header
      _
    $region3: #{forward.1} parent=1 // loop_header
      %s16 = sphi 0, %s20
      %p17 = scmp.ge.s32.totalorder %s16, 4
      %s26 = sphi 0, %s28
      %s29 = sphi 0, %s26
      %s30 = sphi 0, %s29
      %s46 = sphi 0, %s30
      %s50 = sphi 0, %s50
      %s52 = sphi 0, %s50
      %s53 = sphi 0, %s52
      %s67 = sphi 0, %s53
      %s71 = sphi 0, %s71
      %s73 = sphi 0, %s71
      %s74 = sphi 0, %s73
      %s88 = sphi 0, %s74
      %s92 = sphi 0, %s92
      %s94 = sphi 0, %s92
      %s95 = sphi 0, %s94
      %s109 = sphi 0, %s95
      %s113 = sphi 0, %s113
      %s115 = sphi 0, %s113
      %s116 = sphi 0, %s115
      %s130 = sphi 0, %s116
      %s134 = sphi 0, %s134
      %s136 = sphi 0, %s134
      %s137 = sphi 0, %s136
      %s151 = sphi 0, %s137
      %s155 = sphi 0, %s155
      %s157 = sphi 0, %s155
      %s158 = sphi 0, %s157
      %s172 = sphi 0, %s158
      %s178 = sphi 0, %s180
      %s181 = sphi 0, %s178
      %s182 = sphi 0, %s181
      %s198 = sphi 0, %s182
    $region4: #{forward.1} parent=1 // loop_header_branch
      %19 = sbr.rel (%p17) target = $region8
    $region5: #{forward.1} parent=1 // loop_body
      %s21 = ssub.s32 %s16, 1
      %s22 = ssub.s32 %s16, 2
      %s23 = sadd.s32 %s16, 1
      %s24 = ssub.s32 %s16, %s23
      %p25 = scmp.eq.s32.totalorder %s24, 0
      %s27 = sadd.s32 %s26, 1
      %s28 = scalar_select %p25, %s26, %s27
      %p31 = pneg %p25
      %p32 = scmp.eq.s32.totalorder %s16, 1
      %p33 = por %p31, %p32
      %p34 = scmp.ne.s32.totalorder %s26, %s29
      %p35 = scmp.eq.s32.totalorder %s16, 0
      %p36 = por %p34, %p35
      %p37 = scmp.ne.s32.totalorder %s26, %s29
      %p38 = scmp.eq.s32.totalorder %s21, 1
      %p39 = por %p37, %p38
      %p40 = scmp.ne.s32.totalorder %s29, %s30
      %p41 = scmp.eq.s32.totalorder %s21, 0
      %p42 = por %p40, %p41
      %p43 = scmp.ne.s32.totalorder %s29, %s30
      %p44 = scmp.eq.s32.totalorder %s22, 1
      %p45 = por %p43, %p44
      %p47 = scmp.ne.s32.totalorder %s30, %s46
      %p48 = scmp.eq.s32.totalorder %s22, 0
      %p49 = por %p47, %p48
      %s51 = sadd.s32 %s50, 1
      %p54 = scmp.eq.s32.totalorder %s16, 1
      %p55 = scmp.ne.s32.totalorder %s50, %s52
      %p56 = scmp.eq.s32.totalorder %s16, 0
      %p57 = por %p55, %p56
      %p58 = scmp.ne.s32.totalorder %s50, %s52
      %p59 = scmp.eq.s32.totalorder %s21, 1
      %p60 = por %p58, %p59
      %p61 = scmp.ne.s32.totalorder %s52, %s53
      %p62 = scmp.eq.s32.totalorder %s21, 0
      %p63 = por %p61, %p62
      %p64 = scmp.ne.s32.totalorder %s52, %s53
      %p65 = scmp.eq.s32.totalorder %s22, 1
      %p66 = por %p64, %p65
      %p68 = scmp.ne.s32.totalorder %s53, %s67
      %p69 = scmp.eq.s32.totalorder %s22, 0
      %p70 = por %p68, %p69
      %s72 = sadd.s32 %s71, 1
      %p75 = scmp.eq.s32.totalorder %s16, 1
      %p76 = scmp.ne.s32.totalorder %s71, %s73
      %p77 = scmp.eq.s32.totalorder %s16, 0
      %p78 = por %p76, %p77
      %p79 = scmp.ne.s32.totalorder %s71, %s73
      %p80 = scmp.eq.s32.totalorder %s21, 1
      %p81 = por %p79, %p80
      %p82 = scmp.ne.s32.totalorder %s73, %s74
      %p83 = scmp.eq.s32.totalorder %s21, 0
      %p84 = por %p82, %p83
      %p85 = scmp.ne.s32.totalorder %s73, %s74
      %p86 = scmp.eq.s32.totalorder %s22, 1
      %p87 = por %p85, %p86
      %p89 = scmp.ne.s32.totalorder %s74, %s88
      %p90 = scmp.eq.s32.totalorder %s22, 0
      %p91 = por %p89, %p90
      %s93 = sadd.s32 %s92, 1
      %p96 = scmp.eq.s32.totalorder %s16, 1
      %p97 = scmp.ne.s32.totalorder %s92, %s94
      %p98 = scmp.eq.s32.totalorder %s16, 0
      %p99 = por %p97, %p98
      %p100 = scmp.ne.s32.totalorder %s92, %s94
      %p101 = scmp.eq.s32.totalorder %s21, 1
      %p102 = por %p100, %p101
      %p103 = scmp.ne.s32.totalorder %s94, %s95
      %p104 = scmp.eq.s32.totalorder %s21, 0
      %p105 = por %p103, %p104
      %p106 = scmp.ne.s32.totalorder %s94, %s95
      %p107 = scmp.eq.s32.totalorder %s22, 1
      %p108 = por %p106, %p107
      %p110 = scmp.ne.s32.totalorder %s95, %s109
      %p111 = scmp.eq.s32.totalorder %s22, 0
      %p112 = por %p110, %p111
      %s114 = sadd.s32 %s113, 1
      %p117 = scmp.eq.s32.totalorder %s16, 1
      %p118 = scmp.ne.s32.totalorder %s113, %s115
      %p119 = scmp.eq.s32.totalorder %s16, 0
      %p120 = por %p118, %p119
      %p121 = scmp.ne.s32.totalorder %s113, %s115
      %p122 = scmp.eq.s32.totalorder %s21, 1
      %p123 = por %p121, %p122
      %p124 = scmp.ne.s32.totalorder %s115, %s116
      %p125 = scmp.eq.s32.totalorder %s21, 0
      %p126 = por %p124, %p125
      %p127 = scmp.ne.s32.totalorder %s115, %s116
      %p128 = scmp.eq.s32.totalorder %s22, 1
      %p129 = por %p127, %p128
      %p131 = scmp.ne.s32.totalorder %s116, %s130
      %p132 = scmp.eq.s32.totalorder %s22, 0
      %p133 = por %p131, %p132
      %s135 = sadd.s32 %s134, 1
      %p138 = scmp.eq.s32.totalorder %s16, 1
      %p139 = scmp.ne.s32.totalorder %s134, %s136
      %p140 = scmp.eq.s32.totalorder %s16, 0
      %p141 = por %p139, %p140
      %p142 = scmp.ne.s32.totalorder %s134, %s136
      %p143 = scmp.eq.s32.totalorder %s21, 1
      %p144 = por %p142, %p143
      %p145 = scmp.ne.s32.totalorder %s136, %s137
      %p146 = scmp.eq.s32.totalorder %s21, 0
      %p147 = por %p145, %p146
      %p148 = scmp.ne.s32.totalorder %s136, %s137
      %p149 = scmp.eq.s32.totalorder %s22, 1
      %p150 = por %p148, %p149
      %p152 = scmp.ne.s32.totalorder %s137, %s151
      %p153 = scmp.eq.s32.totalorder %s22, 0
      %p154 = por %p152, %p153
      %s156 = sadd.s32 %s155, 1
      %p159 = scmp.eq.s32.totalorder %s16, 1
      %p160 = scmp.ne.s32.totalorder %s155, %s157
      %p161 = scmp.eq.s32.totalorder %s16, 0
      %p162 = por %p160, %p161
      %p163 = scmp.ne.s32.totalorder %s155, %s157
      %p164 = scmp.eq.s32.totalorder %s21, 1
      %p165 = por %p163, %p164
      %p166 = scmp.ne.s32.totalorder %s157, %s158
      %p167 = scmp.eq.s32.totalorder %s21, 0
      %p168 = por %p166, %p167
      %p169 = scmp.ne.s32.totalorder %s157, %s158
      %p170 = scmp.eq.s32.totalorder %s22, 1
      %p171 = por %p169, %p170
      %p173 = scmp.ne.s32.totalorder %s158, %s172
      %p174 = scmp.eq.s32.totalorder %s22, 0
      %p175 = por %p173, %p174
      %s176 = ssub.s32 %s16, %s23
      %p177 = scmp.eq.s32.totalorder %s176, 0
      %s179 = sadd.s32 %s178, 1
      %s180 = scalar_select %p177, %s178, %s179
      %p183 = pneg %p177
      %p184 = scmp.eq.s32.totalorder %s16, 1
      %p185 = por %p183, %p184
      %p186 = scmp.ne.s32.totalorder %s178, %s181
      %p187 = scmp.eq.s32.totalorder %s16, 0
      %p188 = por %p186, %p187
      %p189 = scmp.ne.s32.totalorder %s178, %s181
      %p190 = scmp.eq.s32.totalorder %s21, 1
      %p191 = por %p189, %p190
      %p192 = scmp.ne.s32.totalorder %s181, %s182
      %p193 = scmp.eq.s32.totalorder %s21, 0
      %p194 = por %p192, %p193
      %p195 = scmp.ne.s32.totalorder %s181, %s182
      %p196 = scmp.eq.s32.totalorder %s22, 1
      %p197 = por %p195, %p196
      %p199 = scmp.ne.s32.totalorder %s182, %s198
      %p200 = scmp.eq.s32.totalorder %s22, 0
      %p201 = por %p199, %p200
      %p202 = scmp.le.s32.totalorder 1, %s16
      %p203 = scmp.lt.s32.totalorder %s16, 3
      %p204 = pnand %p202, %p203
      %p205 = pneg %p204
      // Predicated region
      $region9: #{forward.1} parent=5 // pred_check
        _
      $region10: #{forward.1} parent=5 // pred_check_branch
        %207 = sbr.rel (%p204) target = $region12
      $region11: #{forward.1} parent=5 // pred_region
        %s208 = ssub.s32 %s16, 1
        // Predicated region
        $region13: #{forward.1} parent=11 // pred_check
          %p209 = pneg %p63
        $region14: #{forward.1} parent=11 // pred_check_branch
          %211 = sbr.rel (%p209) target = $region16
        $region15: #{forward.1} parent=11 // pred_region
          _
        $region16: #{forward.1} parent=11 // pred_fallthru
          _
        // Predicated region
        $region17: #{forward.1} parent=11 // pred_check
          %p212 = pneg %p84
        $region18: #{forward.1} parent=11 // pred_check_branch
          %214 = sbr.rel (%p212) target = $region20
        $region19: #{forward.1} parent=11 // pred_region
          _
        $region20: #{forward.1} parent=11 // pred_fallthru
          _
        // Predicated region
        $region21: #{forward.1} parent=11 // pred_check
          %p215 = pneg %p105
        $region22: #{forward.1} parent=11 // pred_check_branch
          %217 = sbr.rel (%p215) target = $region24
        $region23: #{forward.1} parent=11 // pred_region
          _
        $region24: #{forward.1} parent=11 // pred_fallthru
          _
        // Predicated region
        $region25: #{forward.1} parent=11 // pred_check
          %p218 = pneg %p126
        $region26: #{forward.1} parent=11 // pred_check_branch
          %220 = sbr.rel (%p218) target = $region28
        $region27: #{forward.1} parent=11 // pred_region
          _
        $region28: #{forward.1} parent=11 // pred_fallthru
          _
        // Predicated region
        $region29: #{forward.1} parent=11 // pred_check
          %p221 = pneg %p147
        $region30: #{forward.1} parent=11 // pred_check_branch
          %223 = sbr.rel (%p221) target = $region32
        $region31: #{forward.1} parent=11 // pred_region
          _
        $region32: #{forward.1} parent=11 // pred_fallthru
          _
        // Predicated region
        $region33: #{forward.1} parent=11 // pred_check
          %p224 = pneg %p168
        $region34: #{forward.1} parent=11 // pred_check_branch
          %226 = sbr.rel (%p224) target = $region36
        $region35: #{forward.1} parent=11 // pred_region
          _
        $region36: #{forward.1} parent=11 // pred_fallthru
          _
      $region12: #{forward.1} parent=5 // pred_fallthru
        _
      %p227 = scmp.lt.s32.totalorder %s16, 2
      // Predicated region
      $region37: #{forward.1} parent=5 // pred_check
        %p228 = pneg %p227
      $region38: #{forward.1} parent=5 // pred_check_branch
        %230 = sbr.rel (%p228) target = $region40
      $region39: #{forward.1} parent=5 // pred_region
        // Predicated region
        $region41: #{forward.1} parent=39 // pred_check
          %p231 = pneg %p36
        $region42: #{forward.1} parent=39 // pred_check_branch
          %233 = sbr.rel (%p231) target = $region44
        $region43: #{forward.1} parent=39 // pred_region
          %p234 = scmp.lt.s32.totalorder %s16, 1
          %s235 = scalar_select %p234, %s16, 1
          %s236 = smul.addr %s235, 10
          %s237 = smul.addr %s236, 8
          %s238 = scalar_lea.vmem %s0, %s237
        $region44: #{forward.1} parent=39 // pred_fallthru
          _
      $region40: #{forward.1} parent=5 // pred_fallthru
        _
      %p239 = scmp.le.s32.totalorder 1, %s16
      %p240 = scmp.lt.s32.totalorder %s16, 3
      %p241 = pnand %p239, %p240
      %p242 = pneg %p241
      // Predicated region
      $region45: #{forward.1} parent=5 // pred_check
        _
      $region46: #{forward.1} parent=5 // pred_check_branch
        %244 = sbr.rel (%p241) target = $region48
      $region47: #{forward.1} parent=5 // pred_region
        %s245 = ssub.s32 %s16, 1
        %p246 = scmp.lt.s32.totalorder %s21, 1
        %s247 = scalar_select %p246, %s21, 1
        %s248 = smul.addr %s247, 10
        %s249 = smul.addr %s248, 8
        %s250 = scalar_lea.vmem %s0, %s249
        %p251 = pneg %p42
        %p252 = pneg %p39
        %p253 = pneg %p63
        %p254 = pneg %p60
        %p255 = pneg %p84
        %p256 = pneg %p81
        %p257 = pneg %p105
        %p258 = pneg %p102
        %p259 = pneg %p126
        %p260 = pneg %p123
        %p261 = pneg %p147
        %p262 = pneg %p144
        %p263 = pneg %p168
        %p264 = pneg %p165
        %p265 = pneg %p194
        %p266 = pneg %p191
        %s267 = sand.u32 %s181, 1
        %s268 = scalar_lea.sflag [#allocation6], %s267
        %s269 = sand.u32 %s181, 1
        %s270 = smul.addr %s269, 4
        %s271 = scalar_lea.vmem [#allocation5], %s270
        %p272 = scmp.lt.s32.totalorder %s21, 1
        %s273 = scalar_select %p272, %s21, 1
        %s274 = smul.addr %s273, 10
        %s275 = smul.addr %s274, 8
        %s276 = scalar_lea.vmem %s0, %s275
        %v278 = vld [vmem:[%s276] sm:$0xff]
        %v279 = vld [vmem:[%s276 + $0x8] sm:$0xff]
        %v280 = vld [vmem:[%s276 + $0x10] sm:$0xff]
        %v281 = vld [vmem:[%s276 + $0x18] sm:$0xff]
        %v282 = vld [vmem:[%s276 + $0x20] sm:$0xff]
        %v283 = vld [vmem:[%s276 + $0x28] sm:$0xff]
        %v284 = vld [vmem:[%s276 + $0x30] sm:$0xff]
        %v285 = vld [vmem:[%s276 + $0x38] sm:$0xff]
        %v286 = vld [vmem:[%s276 + $0x40] sm:$0xff]
        %v287 = vld [vmem:[%s276 + $0x48] sm:$0xf]
        %v288 = vpack.c.bf16 %v279, %v278
        %v289 = vpack.c.bf16 %v281, %v280
        %v290 = vpack.c.bf16 %v283, %v282
        %v291 = vpack.c.bf16 %v285, %v284
        %v292 = vpack.c.bf16 %v287, %v286
        %v293 = vld [vmem:[%s1] sm:$0xff]
        %v294 = vld [vmem:[%s1 + $0x8] sm:$0xff]
        %v295 = vld [vmem:[%s1 + $0x10] sm:$0xff]
        %v296 = vld [vmem:[%s1 + $0x18] sm:$0xff]
        %v297 = vld [vmem:[%s1 + $0x20] sm:$0xff]
        %v298 = vld [vmem:[%s1 + $0x28] sm:$0xff]
        %v299 = vld [vmem:[%s1 + $0x30] sm:$0xff]
        %v300 = vld [vmem:[%s1 + $0x38] sm:$0xff]
        %v301 = vld [vmem:[%s276 + $0x1] sm:$0xff]
        %v302 = vld [vmem:[%s276 + $0x9] sm:$0xff]
        %v303 = vld [vmem:[%s276 + $0x11] sm:$0xff]
        %v304 = vld [vmem:[%s276 + $0x19] sm:$0xff]
        %v305 = vld [vmem:[%s276 + $0x21] sm:$0xff]
        %v306 = vld [vmem:[%s276 + $0x29] sm:$0xff]
        %v307 = vld [vmem:[%s276 + $0x31] sm:$0xff]
        %v308 = vld [vmem:[%s276 + $0x39] sm:$0xff]
        %v309 = vld [vmem:[%s276 + $0x41] sm:$0xff]
        %v310 = vld [vmem:[%s276 + $0x49] sm:$0xf]
        %v311 = vpack.c.bf16 %v302, %v301
        %v312 = vpack.c.bf16 %v304, %v303
        %v313 = vpack.c.bf16 %v306, %v305
        %v314 = vpack.c.bf16 %v308, %v307
        %v315 = vpack.c.bf16 %v310, %v309
        %s316 = scalar_lea.vmem %s1, 64
        %v317 = vld [vmem:[%s316] sm:$0xff]
        %v318 = vld [vmem:[%s316 + $0x8] sm:$0xff]
        %v319 = vld [vmem:[%s316 + $0x10] sm:$0xff]
        %v320 = vld [vmem:[%s316 + $0x18] sm:$0xff]
        %v321 = vld [vmem:[%s316 + $0x20] sm:$0xff]
        %v322 = vld [vmem:[%s316 + $0x28] sm:$0xff]
        %v323 = vld [vmem:[%s316 + $0x30] sm:$0xff]
        %v324 = vld [vmem:[%s316 + $0x38] sm:$0xff]
        %v333 = vunpack.c.l.b16 %v317
        %v334 = vunpack.c.h.b16 %v317
        %v335 = vunpack.c.l.b16 %v318
        %v336 = vunpack.c.h.b16 %v318
        %v337 = vunpack.c.l.b16 %v319
        %v338 = vunpack.c.h.b16 %v319
        %v339 = vunpack.c.l.b16 %v320
        %v340 = vunpack.c.h.b16 %v320
        %v341 = vunpack.c.l.b16 %v321
        %v342 = vunpack.c.h.b16 %v321
        %v343 = vunpack.c.l.b16 %v322
        %v344 = vunpack.c.h.b16 %v322
        %v345 = vunpack.c.l.b16 %v323
        %v346 = vunpack.c.h.b16 %v323
        %v347 = vunpack.c.l.b16 %v324
        %v348 = vunpack.c.h.b16 %v324
        %v349 = vpack.c.b16 %v335, %v333
        %v350 = vpack.c.b16 %v336, %v334
        %v351 = vpack.c.b16 %v339, %v337
        %v352 = vpack.c.b16 %v340, %v338
        %v353 = vpack.c.b16 %v343, %v341
        %v354 = vpack.c.b16 %v344, %v342
        %v355 = vpack.c.b16 %v347, %v345
        %v356 = vpack.c.b16 %v348, %v346
        %vm365 = vcmask 523264
        %v367 = vsel %vm365, %v311, 0
        %v370 = vsel %vm365, %v312, 0
        %v373 = vsel %vm365, %v313, 0
        %v376 = vsel %vm365, %v314, 0
        %v379 = vsel %vm365, %v315, 0
        %381 = vmatprep.subr.bf16.mxu0 %v350
        %382 = vmatpush1.bf16.msra.mxu0 %v349
        %383 = vmatprep.subr.bf16.mxu0 %v352
        %384 = vmatpush1.bf16.msra.mxu0 %v351
        %385 = vmatprep.subr.bf16.mxu0 %v354
        %386 = vmatpush1.bf16.msra.mxu0 %v353
        %387 = vmatprep.subr.bf16.mxu0 %v356
        %388 = vmatpush1.bf16.msra.mxu0 %v355
        %389 = vmatprep.subr.bf16.mxu0 0
        %390 = vmatpush1.bf16.msra.mxu0 0
        %391 = vmatprep.subr.bf16.mxu0 0
        %392 = vmatpush1.bf16.msra.mxu0 0
        %393 = vmatprep.subr.bf16.mxu0 0
        %394 = vmatpush1.bf16.msra.mxu0 0
        %395 = vmatprep.subr.bf16.mxu0 0
        %396 = vmatpush1.bf16.msra.mxu0 0
        %397 = vmatprep.subr.bf16.mxu0 0
        %398 = vmatpush1.bf16.msra.mxu0 0
        %399 = vmatprep.subr.bf16.mxu0 0
        %400 = vmatpush1.bf16.msra.mxu0 0
        %401 = vmatprep.subr.bf16.mxu0 0
        %402 = vmatpush1.bf16.msra.mxu0 0
        %403 = vmatprep.subr.bf16.mxu0 0
        %404 = vmatpush1.bf16.msra.mxu0 0
        %405 = vmatprep.subr.bf16.mxu0 0
        %406 = vmatpush1.bf16.msra.mxu0 0
        %407 = vmatprep.subr.bf16.mxu0 0
        %408 = vmatpush1.bf16.msra.mxu0 0
        %409 = vmatprep.subr.bf16.mxu0 0
        %410 = vmatpush1.bf16.msra.mxu0 0
        %411 = vmatprep.subr.bf16.mxu0 0
        %412 = vmatpush1.bf16.msra.mxu0 0
        %413 = vmatprep.mubr.bf16.mxu0 0
        %414 = vmatmul.mubr.bf16.gmra.mrb[0].mxu0 %v367
        %v415 = vpop.f32.mrb[0].mxu0
        %v416 = vadd.f32 0.0, %v415
        %v417 = vpop.f32.mrb[0].mxu0
        %v418 = vadd.f32 0.0, %v417
        %v419 = vpop.f32.mrb[0].mxu0
        %v420 = vadd.f32 0.0, %v419
        %v421 = vpop.f32.mrb[0].mxu0
        %v422 = vadd.f32 0.0, %v421
        %423 = vmatprep.mubr.bf16.mxu0 0
        %424 = vmatmul.mubr.bf16.gmra.mrb[0].mxu0 %v370
        %v425 = vpop.f32.mrb[0].mxu0
        %v426 = vadd.f32 0.0, %v425
        %v427 = vpop.f32.mrb[0].mxu0
        %v428 = vadd.f32 0.0, %v427
        %v429 = vpop.f32.mrb[0].mxu0
        %v430 = vadd.f32 0.0, %v429
        %v431 = vpop.f32.mrb[0].mxu0
        %v432 = vadd.f32 0.0, %v431
        %433 = vmatprep.mubr.bf16.mxu0 0
        %434 = vmatmul.mubr.bf16.gmra.mrb[0].mxu0 %v373
        %v435 = vpop.f32.mrb[0].mxu0
        %v436 = vadd.f32 0.0, %v435
        %v437 = vpop.f32.mrb[0].mxu0
        %v438 = vadd.f32 0.0, %v437
        %v439 = vpop.f32.mrb[0].mxu0
        %v440 = vadd.f32 0.0, %v439
        %v441 = vpop.f32.mrb[0].mxu0
        %v442 = vadd.f32 0.0, %v441
        %443 = vmatprep.mubr.bf16.mxu0 0
        %444 = vmatmul.mubr.bf16.gmra.mrb[0].mxu0 %v376
        %v445 = vpop.f32.mrb[0].mxu0
        %v446 = vadd.f32 0.0, %v445
        %v447 = vpop.f32.mrb[0].mxu0
        %v448 = vadd.f32 0.0, %v447
        %v449 = vpop.f32.mrb[0].mxu0
        %v450 = vadd.f32 0.0, %v449
        %v451 = vpop.f32.mrb[0].mxu0
        %v452 = vadd.f32 0.0, %v451
        %453 = vmatprep.mubr.bf16.mxu0 0
        %454 = vmatmul.mubr.bf16.gmra.mrb[0].mxu0 %v379
        %v455 = vpop.f32.mrb[0].mxu0
        %v456 = vadd.f32 0.0, %v455
        %v457 = vpop.f32.mrb[0].mxu0
        %v458 = vadd.f32 0.0, %v457
        %v459 = vpop.f32.mrb[0].mxu0
        %v460 = vadd.f32 0.0, %v459
        %v461 = vpop.f32.mrb[0].mxu0
        %v462 = vadd.f32 0.0, %v461
        %463 = vdwg.mxu0
        %v472 = vunpack.c.l.b16 %v293
        %v473 = vunpack.c.h.b16 %v293
        %v474 = vunpack.c.l.b16 %v294
        %v475 = vunpack.c.h.b16 %v294
        %v476 = vunpack.c.l.b16 %v295
        %v477 = vunpack.c.h.b16 %v295
        %v478 = vunpack.c.l.b16 %v296
        %v479 = vunpack.c.h.b16 %v296
        %v480 = vunpack.c.l.b16 %v297
        %v481 = vunpack.c.h.b16 %v297
        %v482 = vunpack.c.l.b16 %v298
        %v483 = vunpack.c.h.b16 %v298
        %v484 = vunpack.c.l.b16 %v299
        %v485 = vunpack.c.h.b16 %v299
        %v486 = vunpack.c.l.b16 %v300
        %v487 = vunpack.c.h.b16 %v300
        %v488 = vpack.c.b16 %v474, %v472
        %v489 = vpack.c.b16 %v475, %v473
        %v490 = vpack.c.b16 %v478, %v476
        %v491 = vpack.c.b16 %v479, %v477
        %v492 = vpack.c.b16 %v482, %v480
        %v493 = vpack.c.b16 %v483, %v481
        %v494 = vpack.c.b16 %v486, %v484
        %v495 = vpack.c.b16 %v487, %v485
        %v505 = vsel %vm365, %v288, 0
        %v508 = vsel %vm365, %v289, 0
        %v511 = vsel %vm365, %v290, 0
        %v514 = vsel %vm365, %v291, 0
        %v517 = vsel %vm365, %v292, 0
        %519 = vmatprep.subr.bf16.mxu0 %v489
        %520 = vmatpush1.bf16.msra.mxu0 %v488
        %521 = vmatprep.subr.bf16.mxu0 %v491
        %522 = vmatpush1.bf16.msra.mxu0 %v490
        %523 = vmatprep.subr.bf16.mxu0 %v493
        %524 = vmatpush1.bf16.msra.mxu0 %v492
        %525 = vmatprep.subr.bf16.mxu0 %v495
        %526 = vmatpush1.bf16.msra.mxu0 %v494
        %527 = vmatprep.subr.bf16.mxu0 0
        %528 = vmatpush1.bf16.msra.mxu0 0
        %529 = vmatprep.subr.bf16.mxu0 0
        %530 = vmatpush1.bf16.msra.mxu0 0
        %531 = vmatprep.subr.bf16.mxu0 0
        %532 = vmatpush1.bf16.msra.mxu0 0
        %533 = vmatprep.subr.bf16.mxu0 0
        %534 = vmatpush1.bf16.msra.mxu0 0
        %535 = vmatprep.subr.bf16.mxu0 0
        %536 = vmatpush1.bf16.msra.mxu0 0
        %537 = vmatprep.subr.bf16.mxu0 0
        %538 = vmatpush1.bf16.msra.mxu0 0
        %539 = vmatprep.subr.bf16.mxu0 0
        %540 = vmatpush1.bf16.msra.mxu0 0
        %541 = vmatprep.subr.bf16.mxu0 0
        %542 = vmatpush1.bf16.msra.mxu0 0
        %543 = vmatprep.subr.bf16.mxu0 0
        %544 = vmatpush1.bf16.msra.mxu0 0
        %545 = vmatprep.subr.bf16.mxu0 0
        %546 = vmatpush1.bf16.msra.mxu0 0
        %547 = vmatprep.subr.bf16.mxu0 0
        %548 = vmatpush1.bf16.msra.mxu0 0
        %549 = vmatprep.subr.bf16.mxu0 0
        %550 = vmatpush1.bf16.msra.mxu0 0
        %551 = vmatprep.mubr.bf16.mxu0 0
        %552 = vmatmul.mubr.bf16.gmra.mrb[0].mxu0 %v505
        %v553 = vpop.f32.mrb[0].mxu0
        %v554 = vadd.f32 %v416, %v553
        %v555 = vpop.f32.mrb[0].mxu0
        %v556 = vadd.f32 %v418, %v555
        %v557 = vpop.f32.mrb[0].mxu0
        %v558 = vadd.f32 %v420, %v557
        %v559 = vpop.f32.mrb[0].mxu0
        %v560 = vadd.f32 %v422, %v559
        %561 = vmatprep.mubr.bf16.mxu0 0
        %562 = vmatmul.mubr.bf16.gmra.mrb[0].mxu0 %v508
        %v563 = vpop.f32.mrb[0].mxu0
        %v564 = vadd.f32 %v426, %v563
        %v565 = vpop.f32.mrb[0].mxu0
        %v566 = vadd.f32 %v428, %v565
        %v567 = vpop.f32.mrb[0].mxu0
        %v568 = vadd.f32 %v430, %v567
        %v569 = vpop.f32.mrb[0].mxu0
        %v570 = vadd.f32 %v432, %v569
        %571 = vmatprep.mubr.bf16.mxu0 0
        %572 = vmatmul.mubr.bf16.gmra.mrb[0].mxu0 %v511
        %v573 = vpop.f32.mrb[0].mxu0
        %v574 = vadd.f32 %v436, %v573
        %v575 = vpop.f32.mrb[0].mxu0
        %v576 = vadd.f32 %v438, %v575
        %v577 = vpop.f32.mrb[0].mxu0
        %v578 = vadd.f32 %v440, %v577
        %v579 = vpop.f32.mrb[0].mxu0
        %v580 = vadd.f32 %v442, %v579
        %581 = vmatprep.mubr.bf16.mxu0 0
        %582 = vmatmul.mubr.bf16.gmra.mrb[0].mxu0 %v514
        %v583 = vpop.f32.mrb[0].mxu0
        %v584 = vadd.f32 %v446, %v583
        %v585 = vpop.f32.mrb[0].mxu0
        %v586 = vadd.f32 %v448, %v585
        %v587 = vpop.f32.mrb[0].mxu0
        %v588 = vadd.f32 %v450, %v587
        %v589 = vpop.f32.mrb[0].mxu0
        %v590 = vadd.f32 %v452, %v589
        %591 = vmatprep.mubr.bf16.mxu0 0
        %592 = vmatmul.mubr.bf16.gmra.mrb[0].mxu0 %v517
        %v593 = vpop.f32.mrb[0].mxu0
        %v594 = vadd.f32 %v456, %v593
        %v595 = vpop.f32.mrb[0].mxu0
        %v596 = vadd.f32 %v458, %v595
        %v597 = vpop.f32.mrb[0].mxu0
        %v598 = vadd.f32 %v460, %v597
        %v599 = vpop.f32.mrb[0].mxu0
        %v600 = vadd.f32 %v462, %v599
        %601 = vdwg.mxu0
        %v602 = vld [vmem:[%s276 + $0x2] sm:$0xff]
        %v603 = vld [vmem:[%s276 + $0xa] sm:$0xff]
        %v604 = vld [vmem:[%s276 + $0x12] sm:$0xff]
        %v605 = vld [vmem:[%s276 + $0x1a] sm:$0xff]
        %v606 = vld [vmem:[%s276 + $0x22] sm:$0xff]
        %v607 = vld [vmem:[%s276 + $0x2a] sm:$0xff]
        %v608 = vld [vmem:[%s276 + $0x32] sm:$0xff]
        %v609 = vld [vmem:[%s276 + $0x3a] sm:$0xff]
        %v610 = vld [vmem:[%s276 + $0x42] sm:$0xff]
        %v611 = vld [vmem:[%s276 + $0x4a] sm:$0xf]
        %v612 = vpack.c.bf16 %v603, %v602
        %v613 = vpack.c.bf16 %v605, %v604
        %v614 = vpack.c.bf16 %v607, %v606
        %v615 = vpack.c.bf16 %v609, %v608
        %v616 = vpack.c.bf16 %v611, %v610
        %s617 = scalar_lea.vmem %s1, 128
        %v618 = vld [vmem:[%s617] sm:$0xff]
        %v619 = vld [vmem:[%s617 + $0x8] sm:$0xff]
        %v620 = vld [vmem:[%s617 + $0x10] sm:$0xff]
        %v621 = vld [vmem:[%s617 + $0x18] sm:$0xff]
        %v622 = vld [vmem:[%s617 + $0x20] sm:$0xff]
        %v623 = vld [vmem:[%s617 + $0x28] sm:$0xff]
        %v624 = vld [vmem:[%s617 + $0x30] sm:$0xff]
        %v625 = vld [vmem:[%s617 + $0x38] sm:$0xff]
        %v634 = vunpack.c.l.b16 %v618
        %v635 = vunpack.c.h.b16 %v618
        %v636 = vunpack.c.l.b16 %v619
        %v637 = vunpack.c.h.b16 %v619
        %v638 = vunpack.c.l.b16 %v620
        %v639 = vunpack.c.h.b16 %v620
        %v640 = vunpack.c.l.b16 %v621
        %v641 = vunpack.c.h.b16 %v621
        %v642 = vunpack.c.l.b16 %v622
        %v643 = vunpack.c.h.b16 %v622
        %v644 = vunpack.c.l.b16 %v623
        %v645 = vunpack.c.h.b16 %v623
        %v646 = vunpack.c.l.b16 %v624
        %v647 = vunpack.c.h.b16 %v624
        %v648 = vunpack.c.l.b16 %v625
        %v649 = vunpack.c.h.b16 %v625
        %v650 = vpack.c.b16 %v636, %v634
        %v651 = vpack.c.b16 %v637, %v635
        %v652 = vpack.c.b16 %v640, %v638
        %v653 = vpack.c.b16 %v641, %v639
        %v654 = vpack.c.b16 %v644, %v642
        %v655 = vpack.c.b16 %v645, %v643
        %v656 = vpack.c.b16 %v648, %v646
        %v657 = vpack.c.b16 %v649, %v647
        %v667 = vsel %vm365, %v612, 0
        %v670 = vsel %vm365, %v613, 0
        %v673 = vsel %vm365, %v614, 0
        %v676 = vsel %vm365, %v615, 0
        %v679 = vsel %vm365, %v616, 0
        %681 = vmatprep.subr.bf16.mxu0 %v651
        %682 = vmatpush1.bf16.msra.mxu0 %v650
        %683 = vmatprep.subr.bf16.mxu0 %v653
        %684 = vmatpush1.bf16.msra.mxu0 %v652
        %685 = vmatprep.subr.bf16.mxu0 %v655
        %686 = vmatpush1.bf16.msra.mxu0 %v654
        %687 = vmatprep.subr.bf16.mxu0 %v657
        %688 = vmatpush1.bf16.msra.mxu0 %v656
        %689 = vmatprep.subr.bf16.mxu0 0
        %690 = vmatpush1.bf16.msra.mxu0 0
        %691 = vmatprep.subr.bf16.mxu0 0
        %692 = vmatpush1.bf16.msra.mxu0 0
        %693 = vmatprep.subr.bf16.mxu0 0
        %694 = vmatpush1.bf16.msra.mxu0 0
        %695 = vmatprep.subr.bf16.mxu0 0
        %696 = vmatpush1.bf16.msra.mxu0 0
        %697 = vmatprep.subr.bf16.mxu0 0
        %698 = vmatpush1.bf16.msra.mxu0 0
        %699 = vmatprep.subr.bf16.mxu0 0
        %700 = vmatpush1.bf16.msra.mxu0 0
        %701 = vmatprep.subr.bf16.mxu0 0
        %702 = vmatpush1.bf16.msra.mxu0 0
        %703 = vmatprep.subr.bf16.mxu0 0
        %704 = vmatpush1.bf16.msra.mxu0 0
        %705 = vmatprep.subr.bf16.mxu0 0
        %706 = vmatpush1.bf16.msra.mxu0 0
        %707 = vmatprep.subr.bf16.mxu0 0
        %708 = vmatpush1.bf16.msra.mxu0 0
        %709 = vmatprep.subr.bf16.mxu0 0
        %710 = vmatpush1.bf16.msra.mxu0 0
        %711 = vmatprep.subr.bf16.mxu0 0
        %712 = vmatpush1.bf16.msra.mxu0 0
        %713 = vmatprep.mubr.bf16.mxu0 0
        %714 = vmatmul.mubr.bf16.gmra.mrb[0].mxu0 %v667
        %v715 = vpop.f32.mrb[0].mxu0
        %v716 = vadd.f32 0.0, %v715
        %v717 = vpop.f32.mrb[0].mxu0
        %v718 = vadd.f32 0.0, %v717
        %v719 = vpop.f32.mrb[0].mxu0
        %v720 = vadd.f32 0.0, %v719
        %v721 = vpop.f32.mrb[0].mxu0
        %v722 = vadd.f32 0.0, %v721
        %723 = vmatprep.mubr.bf16.mxu0 0
        %724 = vmatmul.mubr.bf16.gmra.mrb[0].mxu0 %v670
        %v725 = vpop.f32.mrb[0].mxu0
        %v726 = vadd.f32 0.0, %v725
        %v727 = vpop.f32.mrb[0].mxu0
        %v728 = vadd.f32 0.0, %v727
        %v729 = vpop.f32.mrb[0].mxu0
        %v730 = vadd.f32 0.0, %v729
        %v731 = vpop.f32.mrb[0].mxu0
        %v732 = vadd.f32 0.0, %v731
        %733 = vmatprep.mubr.bf16.mxu0 0
        %734 = vmatmul.mubr.bf16.gmra.mrb[0].mxu0 %v673
        %v735 = vpop.f32.mrb[0].mxu0
        %v736 = vadd.f32 0.0, %v735
        %v737 = vpop.f32.mrb[0].mxu0
        %v738 = vadd.f32 0.0, %v737
        %v739 = vpop.f32.mrb[0].mxu0
        %v740 = vadd.f32 0.0, %v739
        %v741 = vpop.f32.mrb[0].mxu0
        %v742 = vadd.f32 0.0, %v741
        %743 = vmatprep.mubr.bf16.mxu0 0
        %744 = vmatmul.mubr.bf16.gmra.mrb[0].mxu0 %v676
        %v745 = vpop.f32.mrb[0].mxu0
        %v746 = vadd.f32 0.0, %v745
        %v747 = vpop.f32.mrb[0].mxu0
        %v748 = vadd.f32 0.0, %v747
        %v749 = vpop.f32.mrb[0].mxu0
        %v750 = vadd.f32 0.0, %v749
        %v751 = vpop.f32.mrb[0].mxu0
        %v752 = vadd.f32 0.0, %v751
        %753 = vmatprep.mubr.bf16.mxu0 0
        %754 = vmatmul.mubr.bf16.gmra.mrb[0].mxu0 %v679
        %v755 = vpop.f32.mrb[0].mxu0
        %v756 = vadd.f32 0.0, %v755
        %v757 = vpop.f32.mrb[0].mxu0
        %v758 = vadd.f32 0.0, %v757
        %v759 = vpop.f32.mrb[0].mxu0
        %v760 = vadd.f32 0.0, %v759
        %v761 = vpop.f32.mrb[0].mxu0
        %v762 = vadd.f32 0.0, %v761
        %763 = vdwg.mxu0
        %v764 = vadd.f32 %v554, %v716
        %v765 = vadd.f32 %v556, %v718
        %v766 = vadd.f32 %v558, %v720
        %v767 = vadd.f32 %v560, %v722
        %v768 = vadd.f32 %v564, %v726
        %v769 = vadd.f32 %v566, %v728
        %v770 = vadd.f32 %v568, %v730
        %v771 = vadd.f32 %v570, %v732
        %v772 = vadd.f32 %v574, %v736
        %v773 = vadd.f32 %v576, %v738
        %v774 = vadd.f32 %v578, %v740
        %v775 = vadd.f32 %v580, %v742
        %v776 = vadd.f32 %v584, %v746
        %v777 = vadd.f32 %v586, %v748
        %v778 = vadd.f32 %v588, %v750
        %v779 = vadd.f32 %v590, %v752
        %v780 = vadd.f32 %v594, %v756
        %v781 = vadd.f32 %v596, %v758
        %v782 = vadd.f32 %v598, %v760
        %v783 = vadd.f32 %v600, %v762
        %v784 = vld [vmem:[%s276 + $0x3] sm:$0xff]
        %v785 = vld [vmem:[%s276 + $0xb] sm:$0xff]
        %v786 = vld [vmem:[%s276 + $0x13] sm:$0xff]
        %v787 = vld [vmem:[%s276 + $0x1b] sm:$0xff]
        %v788 = vld [vmem:[%s276 + $0x23] sm:$0xff]
        %v789 = vld [vmem:[%s276 + $0x2b] sm:$0xff]
        %v790 = vld [vmem:[%s276 + $0x33] sm:$0xff]
        %v791 = vld [vmem:[%s276 + $0x3b] sm:$0xff]
        %v792 = vld [vmem:[%s276 + $0x43] sm:$0xff]
        %v793 = vld [vmem:[%s276 + $0x4b] sm:$0xf]
        %v794 = vpack.c.bf16 %v785, %v784
        %v795 = vpack.c.bf16 %v787, %v786
        %v796 = vpack.c.bf16 %v789, %v788
        %v797 = vpack.c.bf16 %v791, %v790
        %v798 = vpack.c.bf16 %v793, %v792
        %s799 = scalar_lea.vmem %s1, 192
        %v800 = vld [vmem:[%s799] sm:$0xff]
        %v801 = vld [vmem:[%s799 + $0x8] sm:$0xff]
        %v802 = vld [vmem:[%s799 + $0x10] sm:$0xff]
        %v803 = vld [vmem:[%s799 + $0x18] sm:$0xff]
        %v804 = vld [vmem:[%s799 + $0x20] sm:$0xff]
        %v805 = vld [vmem:[%s799 + $0x28] sm:$0xff]
        %v806 = vld [vmem:[%s799 + $0x30] sm:$0xff]
        %v807 = vld [vmem:[%s799 + $0x38] sm:$0xff]
        %v816 = vunpack.c.l.b16 %v800
        %v817 = vunpack.c.h.b16 %v800
        %v818 = vunpack.c.l.b16 %v801
        %v819 = vunpack.c.h.b16 %v801
        %v820 = vunpack.c.l.b16 %v802
        %v821 = vunpack.c.h.b16 %v802
        %v822 = vunpack.c.l.b16 %v803
        %v823 = vunpack.c.h.b16 %v803
        %v824 = vunpack.c.l.b16 %v804
        %v825 = vunpack.c.h.b16 %v804
        %v826 = vunpack.c.l.b16 %v805
        %v827 = vunpack.c.h.b16 %v805
        %v828 = vunpack.c.l.b16 %v806
        %v829 = vunpack.c.h.b16 %v806
        %v830 = vunpack.c.l.b16 %v807
        %v831 = vunpack.c.h.b16 %v807
        %v832 = vpack.c.b16 %v818, %v816
        %v833 = vpack.c.b16 %v819, %v817
        %v834 = vpack.c.b16 %v822, %v820
        %v835 = vpack.c.b16 %v823, %v821
        %v836 = vpack.c.b16 %v826, %v824
        %v837 = vpack.c.b16 %v827, %v825
        %v838 = vpack.c.b16 %v830, %v828
        %v839 = vpack.c.b16 %v831, %v829
        %v849 = vsel %vm365, %v794, 0
        %v852 = vsel %vm365, %v795, 0
        %v855 = vsel %vm365, %v796, 0
        %v858 = vsel %vm365, %v797, 0
        %v861 = vsel %vm365, %v798, 0
        %863 = vmatprep.subr.bf16.mxu0 %v833
        %864 = vmatpush1.bf16.msra.mxu0 %v832
        %865 = vmatprep.subr.bf16.mxu0 %v835
        %866 = vmatpush1.bf16.msra.mxu0 %v834
        %867 = vmatprep.subr.bf16.mxu0 %v837
        %868 = vmatpush1.bf16.msra.mxu0 %v836
        %869 = vmatprep.subr.bf16.mxu0 %v839
        %870 = vmatpush1.bf16.msra.mxu0 %v838
        %871 = vmatprep.subr.bf16.mxu0 0
        %872 = vmatpush1.bf16.msra.mxu0 0
        %873 = vmatprep.subr.bf16.mxu0 0
        %874 = vmatpush1.bf16.msra.mxu0 0
        %875 = vmatprep.subr.bf16.mxu0 0
        %876 = vmatpush1.bf16.msra.mxu0 0
        %877 = vmatprep.subr.bf16.mxu0 0
        %878 = vmatpush1.bf16.msra.mxu0 0
        %879 = vmatprep.subr.bf16.mxu0 0
        %880 = vmatpush1.bf16.msra.mxu0 0
        %881 = vmatprep.subr.bf16.mxu0 0
        %882 = vmatpush1.bf16.msra.mxu0 0
        %883 = vmatprep.subr.bf16.mxu0 0
        %884 = vmatpush1.bf16.msra.mxu0 0
        %885 = vmatprep.subr.bf16.mxu0 0
        %886 = vmatpush1.bf16.msra.mxu0 0
        %887 = vmatprep.subr.bf16.mxu0 0
        %888 = vmatpush1.bf16.msra.mxu0 0
        %889 = vmatprep.subr.bf16.mxu0 0
        %890 = vmatpush1.bf16.msra.mxu0 0
        %891 = vmatprep.subr.bf16.mxu0 0
        %892 = vmatpush1.bf16.msra.mxu0 0
        %893 = vmatprep.subr.bf16.mxu0 0
        %894 = vmatpush1.bf16.msra.mxu0 0
        %895 = vmatprep.mubr.bf16.mxu0 0
        %896 = vmatmul.mubr.bf16.gmra.mrb[0].mxu0 %v849
        %v897 = vpop.f32.mrb[0].mxu0
        %v898 = vadd.f32 0.0, %v897
        %v899 = vpop.f32.mrb[0].mxu0
        %v900 = vadd.f32 0.0, %v899
        %v901 = vpop.f32.mrb[0].mxu0
        %v902 = vadd.f32 0.0, %v901
        %v903 = vpop.f32.mrb[0].mxu0
        %v904 = vadd.f32 0.0, %v903
        %905 = vmatprep.mubr.bf16.mxu0 0
        %906 = vmatmul.mubr.bf16.gmra.mrb[0].mxu0 %v852
        %v907 = vpop.f32.mrb[0].mxu0
        %v908 = vadd.f32 0.0, %v907
        %v909 = vpop.f32.mrb[0].mxu0
        %v910 = vadd.f32 0.0, %v909
        %v911 = vpop.f32.mrb[0].mxu0
        %v912 = vadd.f32 0.0, %v911
        %v913 = vpop.f32.mrb[0].mxu0
        %v914 = vadd.f32 0.0, %v913
        %915 = vmatprep.mubr.bf16.mxu0 0
        %916 = vmatmul.mubr.bf16.gmra.mrb[0].mxu0 %v855
        %v917 = vpop.f32.mrb[0].mxu0
        %v918 = vadd.f32 0.0, %v917
        %v919 = vpop.f32.mrb[0].mxu0
        %v920 = vadd.f32 0.0, %v919
        %v921 = vpop.f32.mrb[0].mxu0
        %v922 = vadd.f32 0.0, %v921
        %v923 = vpop.f32.mrb[0].mxu0
        %v924 = vadd.f32 0.0, %v923
        %925 = vmatprep.mubr.bf16.mxu0 0
        %926 = vmatmul.mubr.bf16.gmra.mrb[0].mxu0 %v858
        %v927 = vpop.f32.mrb[0].mxu0
        %v928 = vadd.f32 0.0, %v927
        %v929 = vpop.f32.mrb[0].mxu0
        %v930 = vadd.f32 0.0, %v929
        %v931 = vpop.f32.mrb[0].mxu0
        %v932 = vadd.f32 0.0, %v931
        %v933 = vpop.f32.mrb[0].mxu0
        %v934 = vadd.f32 0.0, %v933
        %935 = vmatprep.mubr.bf16.mxu0 0
        %936 = vmatmul.mubr.bf16.gmra.mrb[0].mxu0 %v861
        %v937 = vpop.f32.mrb[0].mxu0
        %v938 = vadd.f32 0.0, %v937
        %v939 = vpop.f32.mrb[0].mxu0
        %v940 = vadd.f32 0.0, %v939
        %v941 = vpop.f32.mrb[0].mxu0
        %v942 = vadd.f32 0.0, %v941
        %v943 = vpop.f32.mrb[0].mxu0
        %v944 = vadd.f32 0.0, %v943
        %945 = vdwg.mxu0
        %v946 = vadd.f32 %v764, %v898
        %v947 = vadd.f32 %v765, %v900
        %v948 = vadd.f32 %v766, %v902
        %v949 = vadd.f32 %v767, %v904
        %v950 = vadd.f32 %v768, %v908
        %v951 = vadd.f32 %v769, %v910
        %v952 = vadd.f32 %v770, %v912
        %v953 = vadd.f32 %v771, %v914
        %v954 = vadd.f32 %v772, %v918
        %v955 = vadd.f32 %v773, %v920
        %v956 = vadd.f32 %v774, %v922
        %v957 = vadd.f32 %v775, %v924
        %v958 = vadd.f32 %v776, %v928
        %v959 = vadd.f32 %v777, %v930
        %v960 = vadd.f32 %v778, %v932
        %v961 = vadd.f32 %v779, %v934
        %v962 = vadd.f32 %v780, %v938
        %v963 = vadd.f32 %v781, %v940
        %v964 = vadd.f32 %v782, %v942
        %v965 = vadd.f32 %v783, %v944
        %v966 = vld [vmem:[%s276 + $0x4] sm:$0xff]
        %v967 = vld [vmem:[%s276 + $0xc] sm:$0xff]
        %v968 = vld [vmem:[%s276 + $0x14] sm:$0xff]
        %v969 = vld [vmem:[%s276 + $0x1c] sm:$0xff]
        %v970 = vld [vmem:[%s276 + $0x24] sm:$0xff]
        %v971 = vld [vmem:[%s276 + $0x2c] sm:$0xff]
        %v972 = vld [vmem:[%s276 + $0x34] sm:$0xff]
        %v973 = vld [vmem:[%s276 + $0x3c] sm:$0xff]
        %v974 = vld [vmem:[%s276 + $0x44] sm:$0xff]
        %v975 = vld [vmem:[%s276 + $0x4c] sm:$0xf]
        %v976 = vpack.c.bf16 %v967, %v966
        %v977 = vpack.c.bf16 %v969, %v968
        %v978 = vpack.c.bf16 %v971, %v970
        %v979 = vpack.c.bf16 %v973, %v972
        %v980 = vpack.c.bf16 %v975, %v974
        %s981 = scalar_lea.vmem %s1, 256
        %v982 = vld [vmem:[%s981] sm:$0xff]
        %v983 = vld [vmem:[%s981 + $0x8] sm:$0xff]
        %v984 = vld [vmem:[%s981 + $0x10] sm:$0xff]
        %v985 = vld [vmem:[%s981 + $0x18] sm:$0xff]
        %v986 = vld [vmem:[%s981 + $0x20] sm:$0xff]
        %v987 = vld [vmem:[%s981 + $0x28] sm:$0xff]
        %v988 = vld [vmem:[%s981 + $0x30] sm:$0xff]
        %v989 = vld [vmem:[%s981 + $0x38] sm:$0xff]
        %v998 = vunpack.c.l.b16 %v982
        %v999 = vunpack.c.h.b16 %v982
        %v1000 = vunpack.c.l.b16 %v983
        %v1001 = vunpack.c.h.b16 %v983
        %v1002 = vunpack.c.l.b16 %v984
        %v1003 = vunpack.c.h.b16 %v984
        %v1004 = vunpack.c.l.b16 %v985
        %v1005 = vunpack.c.h.b16 %v985
        %v1006 = vunpack.c.l.b16 %v986
        %v1007 = vunpack.c.h.b16 %v986
        %v1008 = vunpack.c.l.b16 %v987
        %v1009 = vunpack.c.h.b16 %v987
        %v1010 = vunpack.c.l.b16 %v988
        %v1011 = vunpack.c.h.b16 %v988
        %v1012 = vunpack.c.l.b16 %v989
        %v1013 = vunpack.c.h.b16 %v989
        %v1014 = vpack.c.b16 %v1000, %v998
        %v1015 = vpack.c.b16 %v1001, %v999
        %v1016 = vpack.c.b16 %v1004, %v1002
        %v1017 = vpack.c.b16 %v1005, %v1003
        %v1018 = vpack.c.b16 %v1008, %v1006
        %v1019 = vpack.c.b16 %v1009, %v1007
        %v1020 = vpack.c.b16 %v1012, %v1010
        %v1021 = vpack.c.b16 %v1013, %v1011
        %v1031 = vsel %vm365, %v976, 0
        %v1034 = vsel %vm365, %v977, 0
        %v1037 = vsel %vm365, %v978, 0
        %v1040 = vsel %vm365, %v979, 0
        %v1043 = vsel %vm365, %v980, 0
        %1045 = vmatprep.subr.bf16.mxu0 %v1015
        %1046 = vmatpush1.bf16.msra.mxu0 %v1014
        %1047 = vmatprep.subr.bf16.mxu0 %v1017
        %1048 = vmatpush1.bf16.msra.mxu0 %v1016
        %1049 = vmatprep.subr.bf16.mxu0 %v1019
        %1050 = vmatpush1.bf16.msra.mxu0 %v1018
        %1051 = vmatprep.subr.bf16.mxu0 %v1021
        %1052 = vmatpush1.bf16.msra.mxu0 %v1020
        %1053 = vmatprep.subr.bf16.mxu0 0
        %1054 = vmatpush1.bf16.msra.mxu0 0
        %1055 = vmatprep.subr.bf16.mxu0 0
        %1056 = vmatpush1.bf16.msra.mxu0 0
        %1057 = vmatprep.subr.bf16.mxu0 0
        %1058 = vmatpush1.bf16.msra.mxu0 0
        %1059 = vmatprep.subr.bf16.mxu0 0
        %1060 = vmatpush1.bf16.msra.mxu0 0
        %1061 = vmatprep.subr.bf16.mxu0 0
        %1062 = vmatpush1.bf16.msra.mxu0 0
        %1063 = vmatprep.subr.bf16.mxu0 0
        %1064 = vmatpush1.bf16.msra.mxu0 0
        %1065 = vmatprep.subr.bf16.mxu0 0
        %1066 = vmatpush1.bf16.msra.mxu0 0
        %1067 = vmatprep.subr.bf16.mxu0 0
        %1068 = vmatpush1.bf16.msra.mxu0 0
        %1069 = vmatprep.subr.bf16.mxu0 0
        %1070 = vmatpush1.bf16.msra.mxu0 0
        %1071 = vmatprep.subr.bf16.mxu0 0
        %1072 = vmatpush1.bf16.msra.mxu0 0
        %1073 = vmatprep.subr.bf16.mxu0 0
        %1074 = vmatpush1.bf16.msra.mxu0 0
        %1075 = vmatprep.subr.bf16.mxu0 0
        %1076 = vmatpush1.bf16.msra.mxu0 0
        %1077 = vmatprep.mubr.bf16.mxu0 0
        %1078 = vmatmul.mubr.bf16.gmra.mrb[0].mxu0 %v1031
        %v1079 = vpop.f32.mrb[0].mxu0
        %v1080 = vadd.f32 0.0, %v1079
        %v1081 = vpop.f32.mrb[0].mxu0
        %v1082 = vadd.f32 0.0, %v1081
        %v1083 = vpop.f32.mrb[0].mxu0
        %v1084 = vadd.f32 0.0, %v1083
        %v1085 = vpop.f32.mrb[0].mxu0
        %v1086 = vadd.f32 0.0, %v1085
        %1087 = vmatprep.mubr.bf16.mxu0 0
        %1088 = vmatmul.mubr.bf16.gmra.mrb[0].mxu0 %v1034
        %v1089 = vpop.f32.mrb[0].mxu0
        %v1090 = vadd.f32 0.0, %v1089
        %v1091 = vpop.f32.mrb[0].mxu0
        %v1092 = vadd.f32 0.0, %v1091
        %v1093 = vpop.f32.mrb[0].mxu0
        %v1094 = vadd.f32 0.0, %v1093
        %v1095 = vpop.f32.mrb[0].mxu0
        %v1096 = vadd.f32 0.0, %v1095
        %1097 = vmatprep.mubr.bf16.mxu0 0
        %1098 = vmatmul.mubr.bf16.gmra.mrb[0].mxu0 %v1037
        %v1099 = vpop.f32.mrb[0].mxu0
        %v1100 = vadd.f32 0.0, %v1099
        %v1101 = vpop.f32.mrb[0].mxu0
        %v1102 = vadd.f32 0.0, %v1101
        %v1103 = vpop.f32.mrb[0].mxu0
        %v1104 = vadd.f32 0.0, %v1103
        %v1105 = vpop.f32.mrb[0].mxu0
        %v1106 = vadd.f32 0.0, %v1105
        %1107 = vmatprep.mubr.bf16.mxu0 0
        %1108 = vmatmul.mubr.bf16.gmra.mrb[0].mxu0 %v1040
        %v1109 = vpop.f32.mrb[0].mxu0
        %v1110 = vadd.f32 0.0, %v1109
        %v1111 = vpop.f32.mrb[0].mxu0
        %v1112 = vadd.f32 0.0, %v1111
        %v1113 = vpop.f32.mrb[0].mxu0
        %v1114 = vadd.f32 0.0, %v1113
        %v1115 = vpop.f32.mrb[0].mxu0
        %v1116 = vadd.f32 0.0, %v1115
        %1117 = vmatprep.mubr.bf16.mxu0 0
        %1118 = vmatmul.mubr.bf16.gmra.mrb[0].mxu0 %v1043
        %v1119 = vpop.f32.mrb[0].mxu0
        %v1120 = vadd.f32 0.0, %v1119
        %v1121 = vpop.f32.mrb[0].mxu0
        %v1122 = vadd.f32 0.0, %v1121
        %v1123 = vpop.f32.mrb[0].mxu0
        %v1124 = vadd.f32 0.0, %v1123
        %v1125 = vpop.f32.mrb[0].mxu0
        %v1126 = vadd.f32 0.0, %v1125
        %1127 = vdwg.mxu0
        %v1128 = vadd.f32 %v946, %v1080
        %v1129 = vadd.f32 %v947, %v1082
        %v1130 = vadd.f32 %v948, %v1084
        %v1131 = vadd.f32 %v949, %v1086
        %v1132 = vadd.f32 %v950, %v1090
        %v1133 = vadd.f32 %v951, %v1092
        %v1134 = vadd.f32 %v952, %v1094
        %v1135 = vadd.f32 %v953, %v1096
        %v1136 = vadd.f32 %v954, %v1100
        %v1137 = vadd.f32 %v955, %v1102
        %v1138 = vadd.f32 %v956, %v1104
        %v1139 = vadd.f32 %v957, %v1106
        %v1140 = vadd.f32 %v958, %v1110
        %v1141 = vadd.f32 %v959, %v1112
        %v1142 = vadd.f32 %v960, %v1114
        %v1143 = vadd.f32 %v961, %v1116
        %v1144 = vadd.f32 %v962, %v1120
        %v1145 = vadd.f32 %v963, %v1122
        %v1146 = vadd.f32 %v964, %v1124
        %v1147 = vadd.f32 %v965, %v1126
        %v1148 = vld [vmem:[%s2] sm:$0x3]
        %v1150 = vlaneseq
        %v1151 = vshrl.u32 %v1150, 7
        %v1152 = vsub.s32 0, %v1151
        %v1153 = vrot.slane %v1148, %v1152
        %v1154 = vlaneseq
        %v1155 = vshrl.u32 %v1154, 7
        %v1156 = vsub.s32 1, %v1155
        %v1157 = vrot.slane %v1148, %v1156
        %v1160 = vadd.f32 %v1128, %v1153
        %v1161 = vadd.f32 %v1129, %v1157
        %v1162 = vadd.f32 %v1130, %v1153
        %v1163 = vadd.f32 %v1131, %v1157
        %v1164 = vadd.f32 %v1132, %v1153
        %v1165 = vadd.f32 %v1133, %v1157
        %v1166 = vadd.f32 %v1134, %v1153
        %v1167 = vadd.f32 %v1135, %v1157
        %v1168 = vadd.f32 %v1136, %v1153
        %v1169 = vadd.f32 %v1137, %v1157
        %v1170 = vadd.f32 %v1138, %v1153
        %v1171 = vadd.f32 %v1139, %v1157
        %v1172 = vadd.f32 %v1140, %v1153
        %v1173 = vadd.f32 %v1141, %v1157
        %v1174 = vadd.f32 %v1142, %v1153
        %v1175 = vadd.f32 %v1143, %v1157
        %v1176 = vadd.f32 %v1144, %v1153
        %v1177 = vadd.f32 %v1145, %v1157
        %v1178 = vadd.f32 %v1146, %v1153
        %v1179 = vadd.f32 %v1147, %v1157
        %v1180 = vmax.f32 %v1160, 0.0
        %v1181 = vmax.f32 %v1161, 0.0
        %v1182 = vmax.f32 %v1162, 0.0
        %v1183 = vmax.f32 %v1163, 0.0
        %v1184 = vmax.f32 %v1164, 0.0
        %v1185 = vmax.f32 %v1165, 0.0
        %v1186 = vmax.f32 %v1166, 0.0
        %v1187 = vmax.f32 %v1167, 0.0
        %v1188 = vmax.f32 %v1168, 0.0
        %v1189 = vmax.f32 %v1169, 0.0
        %v1190 = vmax.f32 %v1170, 0.0
        %v1191 = vmax.f32 %v1171, 0.0
        %v1192 = vmax.f32 %v1172, 0.0
        %v1193 = vmax.f32 %v1173, 0.0
        %v1194 = vmax.f32 %v1174, 0.0
        %v1195 = vmax.f32 %v1175, 0.0
        %v1196 = vmax.f32 %v1176, 0.0
        %v1197 = vmax.f32 %v1177, 0.0
        %v1198 = vmax.f32 %v1178, 0.0
        %v1199 = vmax.f32 %v1179, 0.0
        %v1200 = vmax.f32 %v1180, %v1181
        %v1201 = vmax.f32 %v1182, %v1183
        %v1202 = vmax.f32 %v1184, %v1185
        %v1203 = vmax.f32 %v1186, %v1187
        %v1204 = vmax.f32 %v1188, %v1189
        %v1205 = vmax.f32 %v1190, %v1191
        %v1206 = vmax.f32 %v1192, %v1193
        %v1207 = vmax.f32 %v1194, %v1195
        %v1208 = vmax.f32 %v1196, %v1197
        %v1209 = vmax.f32 %v1198, %v1199
        %1210 = vst [vmem:[#allocation2] sm:$0xff] %v1200
        %1211 = vst [vmem:[#allocation2 + $0x8] sm:$0xff] %v1201
        %1212 = vst [vmem:[#allocation2 + $0x10] sm:$0xff] %v1202
        %1213 = vst [vmem:[#allocation2 + $0x18] sm:$0xff] %v1203
        %1214 = vst [vmem:[#allocation2 + $0x20] sm:$0xff] %v1204
        %1215 = vst [vmem:[#allocation2 + $0x28] sm:$0xff] %v1205
        %1216 = vst [vmem:[#allocation2 + $0x30] sm:$0xff] %v1206
        %1217 = vst [vmem:[#allocation2 + $0x38] sm:$0xff] %v1207
        %1218 = vst [vmem:[#allocation2 + $0x40] sm:$0xff] %v1208
        %1219 = vst [vmem:[#allocation2 + $0x48] sm:$0xf] %v1209
        %1220 = vst [vmem:[#allocation3] sm:$0x3] 0.0
        %1221 = vst [vmem:[#allocation3 + $0xa] sm:$0x3] 0.0
        %v1222 = vld [vmem:[#allocation2] ss:$2 sm:$0xff]
        %s1223 = scalar_lea.vmem [#allocation2], 1
        %v1224 = vld [vmem:[%s1223] ss:$2 sm:$0xff]
        %v1225 = vmax.f32 %v1222, %v1224
        %1226 = vst [vmem:[#allocation3 + $0x2] sm:$0xff] %v1225
        %1227 = vst [vmem:[#allocation3 + $0xc] sm:$0x3] 0.0
        %1228 = vst [vmem:[#allocation3 + $0x16] sm:$0x3] 0.0
        %s1229 = scalar_lea.vmem [#allocation2], 20
        %v1230 = vld [vmem:[%s1229] ss:$2 sm:$0xff]
        %s1231 = scalar_lea.vmem [#allocation2], 21
        %v1232 = vld [vmem:[%s1231] ss:$2 sm:$0xff]
        %v1233 = vmax.f32 %v1230, %v1232
        %1234 = vst [vmem:[#allocation3 + $0xe] sm:$0xff] %v1233
        %1235 = vst [vmem:[#allocation3 + $0x18] sm:$0x3] 0.0
        %1236 = vst [vmem:[#allocation3 + $0x22] sm:$0x3] 0.0
        %s1237 = scalar_lea.vmem [#allocation2], 40
        %v1238 = vld [vmem:[%s1237] ss:$2 sm:$0xff]
        %s1239 = scalar_lea.vmem [#allocation2], 41
        %v1240 = vld [vmem:[%s1239] ss:$2 sm:$0xff]
        %v1241 = vmax.f32 %v1238, %v1240
        %1242 = vst [vmem:[#allocation3 + $0x1a] sm:$0xff] %v1241
        %1243 = vst [vmem:[#allocation3 + $0x24] sm:$0x3] 0.0
        %1244 = vst [vmem:[#allocation3 + $0x2e] sm:$0x3] 0.0
        %s1245 = scalar_lea.vmem [#allocation2], 60
        %v1246 = vld [vmem:[%s1245] ss:$2 sm:$0xff]
        %s1247 = scalar_lea.vmem [#allocation2], 61
        %v1248 = vld [vmem:[%s1247] ss:$2 sm:$0xff]
        %v1249 = vmax.f32 %v1246, %v1248
        %1250 = vst [vmem:[#allocation3 + $0x26] sm:$0xff] %v1249
        %v1251 = vld [vmem:[#allocation3] sm:$0xff]
        %v1252 = vld [vmem:[#allocation3 + $0x8] sm:$0xff]
        %v1253 = vld [vmem:[#allocation3 + $0x10] sm:$0xff]
        %v1254 = vld [vmem:[#allocation3 + $0x18] sm:$0xff]
        %v1255 = vld [vmem:[#allocation3 + $0x20] sm:$0xff]
        %v1256 = vld [vmem:[#allocation3 + $0x28] sm:$0xf]
        %v1257 = vpack.c.bf16 %v1252, %v1251
        %v1258 = vpack.c.bf16 %v1254, %v1253
        %v1259 = vpack.c.bf16 %v1256, %v1255
        %v1260 = vld [vmem:[%s3] sm:$0xf]
        %v1261 = vld [vmem:[%s3 + $0x4] sm:$0xf]
        %v1262 = vld [vmem:[%s3 + $0x8] sm:$0xf]
        %v1263 = vld [vmem:[%s3 + $0xc] sm:$0xf]
        %v1264 = vld [vmem:[%s3 + $0x10] sm:$0xf]
        %v1265 = vld [vmem:[%s3 + $0x14] sm:$0xf]
        %v1266 = vld [vmem:[%s3 + $0x18] sm:$0xf]
        %v1267 = vld [vmem:[%s3 + $0x1c] sm:$0xf]
        %v1268 = vld [vmem:[%s3 + $0x20] sm:$0xf]
        %v1269 = vld [vmem:[%s3 + $0x24] sm:$0xf]
        %v1270 = vld [vmem:[%s3 + $0x28] sm:$0xf]
        %v1271 = vld [vmem:[%s3 + $0x2c] sm:$0xf]
        %v1272 = vld [vmem:[%s3 + $0x30] sm:$0xf]
        %v1273 = vld [vmem:[%s3 + $0x34] sm:$0xf]
        %v1274 = vld [vmem:[%s3 + $0x38] sm:$0xf]
        %v1275 = vld [vmem:[%s3 + $0x3c] sm:$0xf]
        %v1276 = vld [vmem:[#allocation3 + $0x1] sm:$0xff]
        %v1277 = vld [vmem:[#allocation3 + $0x9] sm:$0xff]
        %v1278 = vld [vmem:[#allocation3 + $0x11] sm:$0xff]
        %v1279 = vld [vmem:[#allocation3 + $0x19] sm:$0xff]
        %v1280 = vld [vmem:[#allocation3 + $0x21] sm:$0xff]
        %v1281 = vld [vmem:[#allocation3 + $0x29] sm:$0xf]
        %v1282 = vpack.c.bf16 %v1277, %v1276
        %v1283 = vpack.c.bf16 %v1279, %v1278
        %v1284 = vpack.c.bf16 %v1281, %v1280
        %s1285 = scalar_lea.vmem %s3, 64
        %v1286 = vld [vmem:[%s1285] sm:$0xf]
        %v1287 = vld [vmem:[%s1285 + $0x4] sm:$0xf]
        %v1288 = vld [vmem:[%s1285 + $0x8] sm:$0xf]
        %v1289 = vld [vmem:[%s1285 + $0xc] sm:$0xf]
        %v1290 = vld [vmem:[%s1285 + $0x10] sm:$0xf]
        %v1291 = vld [vmem:[%s1285 + $0x14] sm:$0xf]
        %v1292 = vld [vmem:[%s1285 + $0x18] sm:$0xf]
        %v1293 = vld [vmem:[%s1285 + $0x1c] sm:$0xf]
        %v1294 = vld [vmem:[%s1285 + $0x20] sm:$0xf]
        %v1295 = vld [vmem:[%s1285 + $0x24] sm:$0xf]
        %v1296 = vld [vmem:[%s1285 + $0x28] sm:$0xf]
        %v1297 = vld [vmem:[%s1285 + $0x2c] sm:$0xf]
        %v1298 = vld [vmem:[%s1285 + $0x30] sm:$0xf]
        %v1299 = vld [vmem:[%s1285 + $0x34] sm:$0xf]
        %v1300 = vld [vmem:[%s1285 + $0x38] sm:$0xf]
        %v1301 = vld [vmem:[%s1285 + $0x3c] sm:$0xf]
        %v1318 = vunpack.c.l.b16 %v1286
        %v1319 = vunpack.c.l.b16 %v1287
        %v1320 = vunpack.c.l.b16 %v1288
        %v1321 = vunpack.c.l.b16 %v1289
        %v1322 = vunpack.c.l.b16 %v1290
        %v1323 = vunpack.c.l.b16 %v1291
        %v1324 = vunpack.c.l.b16 %v1292
        %v1325 = vunpack.c.l.b16 %v1293
        %v1326 = vunpack.c.l.b16 %v1294
        %v1327 = vunpack.c.l.b16 %v1295
        %v1328 = vunpack.c.l.b16 %v1296
        %v1329 = vunpack.c.l.b16 %v1297
        %v1330 = vunpack.c.l.b16 %v1298
        %v1331 = vunpack.c.l.b16 %v1299
        %v1332 = vunpack.c.l.b16 %v1300
        %v1333 = vunpack.c.l.b16 %v1301
        %v1334 = vpack.c.b16 %v1319, %v1318
        %v1335 = vpack.c.b16 %v1321, %v1320
        %v1336 = vpack.c.b16 %v1323, %v1322
        %v1337 = vpack.c.b16 %v1325, %v1324
        %v1338 = vpack.c.b16 %v1327, %v1326
        %v1339 = vpack.c.b16 %v1329, %v1328
        %v1340 = vpack.c.b16 %v1331, %v1330
        %v1341 = vpack.c.b16 %v1333, %v1332
        %1350 = vmatprep.subr.bf16.mxu0 0
        %1351 = vmatpush1.bf16.msra.mxu0 %v1334
        %1352 = vmatprep.subr.bf16.mxu0 0
        %1353 = vmatpush1.bf16.msra.mxu0 %v1335
        %1354 = vmatprep.subr.bf16.mxu0 0
        %1355 = vmatpush1.bf16.msra.mxu0 %v1336
        %1356 = vmatprep.subr.bf16.mxu0 0
        %1357 = vmatpush1.bf16.msra.mxu0 %v1337
        %1358 = vmatprep.subr.bf16.mxu0 0
        %1359 = vmatpush1.bf16.msra.mxu0 %v1338
        %1360 = vmatprep.subr.bf16.mxu0 0
        %1361 = vmatpush1.bf16.msra.mxu0 %v1339
        %1362 = vmatprep.subr.bf16.mxu0 0
        %1363 = vmatpush1.bf16.msra.mxu0 %v1340
        %1364 = vmatprep.subr.bf16.mxu0 0
        %1365 = vmatpush1.bf16.msra.mxu0 %v1341
        %1366 = vmatprep.subr.bf16.mxu0 0
        %1367 = vmatpush1.bf16.msra.mxu0 0
        %1368 = vmatprep.subr.bf16.mxu0 0
        %1369 = vmatpush1.bf16.msra.mxu0 0
        %1370 = vmatprep.subr.bf16.mxu0 0
        %1371 = vmatpush1.bf16.msra.mxu0 0
        %1372 = vmatprep.subr.bf16.mxu0 0
        %1373 = vmatpush1.bf16.msra.mxu0 0
        %1374 = vmatprep.subr.bf16.mxu0 0
        %1375 = vmatpush1.bf16.msra.mxu0 0
        %1376 = vmatprep.subr.bf16.mxu0 0
        %1377 = vmatpush1.bf16.msra.mxu0 0
        %1378 = vmatprep.subr.bf16.mxu0 0
        %1379 = vmatpush1.bf16.msra.mxu0 0
        %1380 = vmatprep.subr.bf16.mxu0 0
        %1381 = vmatpush1.bf16.msra.mxu0 0
        %1382 = vmatprep.mubr.bf16.mxu0 0
        %1383 = vmatmul.mubr.bf16.gmra.mrb[0].mxu0 %v1282
        %v1384 = vpop.f32.mrb[0].mxu0
        %v1385 = vadd.f32 0.0, %v1384
        %v1386 = vpop.f32.mrb[0].mxu0
        %v1387 = vpop.f32.mrb[0].mxu0
        %v1388 = vadd.f32 0.0, %v1387
        %v1389 = vpop.f32.mrb[0].mxu0
        %1390 = vmatprep.mubr.bf16.mxu0 0
        %1391 = vmatmul.mubr.bf16.gmra.mrb[0].mxu0 %v1283
        %v1392 = vpop.f32.mrb[0].mxu0
        %v1393 = vadd.f32 0.0, %v1392
        %v1394 = vpop.f32.mrb[0].mxu0
        %v1395 = vpop.f32.mrb[0].mxu0
        %v1396 = vadd.f32 0.0, %v1395
        %v1397 = vpop.f32.mrb[0].mxu0
        %1398 = vmatprep.mubr.bf16.mxu0 0
        %1399 = vmatmul.mubr.bf16.gmra.mrb[0].mxu0 %v1284
        %v1400 = vpop.f32.mrb[0].mxu0
        %v1401 = vadd.f32 0.0, %v1400
        %v1402 = vpop.f32.mrb[0].mxu0
        %v1403 = vpop.f32.mrb[0].mxu0
        %v1404 = vadd.f32 0.0, %v1403
        %v1405 = vpop.f32.mrb[0].mxu0
        %1406 = vdwg.mxu0
        %v1423 = vunpack.c.l.b16 %v1260
        %v1424 = vunpack.c.l.b16 %v1261
        %v1425 = vunpack.c.l.b16 %v1262
        %v1426 = vunpack.c.l.b16 %v1263
        %v1427 = vunpack.c.l.b16 %v1264
        %v1428 = vunpack.c.l.b16 %v1265
        %v1429 = vunpack.c.l.b16 %v1266
        %v1430 = vunpack.c.l.b16 %v1267
        %v1431 = vunpack.c.l.b16 %v1268
        %v1432 = vunpack.c.l.b16 %v1269
        %v1433 = vunpack.c.l.b16 %v1270
        %v1434 = vunpack.c.l.b16 %v1271
        %v1435 = vunpack.c.l.b16 %v1272
        %v1436 = vunpack.c.l.b16 %v1273
        %v1437 = vunpack.c.l.b16 %v1274
        %v1438 = vunpack.c.l.b16 %v1275
        %v1439 = vpack.c.b16 %v1424, %v1423
        %v1440 = vpack.c.b16 %v1426, %v1425
        %v1441 = vpack.c.b16 %v1428, %v1427
        %v1442 = vpack.c.b16 %v1430, %v1429
        %v1443 = vpack.c.b16 %v1432, %v1431
        %v1444 = vpack.c.b16 %v1434, %v1433
        %v1445 = vpack.c.b16 %v1436, %v1435
        %v1446 = vpack.c.b16 %v1438, %v1437
        %1455 = vmatprep.subr.bf16.mxu0 0
        %1456 = vmatpush1.bf16.msra.mxu0 %v1439
        %1457 = vmatprep.subr.bf16.mxu0 0
        %1458 = vmatpush1.bf16.msra.mxu0 %v1440
        %1459 = vmatprep.subr.bf16.mxu0 0
        %1460 = vmatpush1.bf16.msra.mxu0 %v1441
        %1461 = vmatprep.subr.bf16.mxu0 0
        %1462 = vmatpush1.bf16.msra.mxu0 %v1442
        %1463 = vmatprep.subr.bf16.mxu0 0
        %1464 = vmatpush1.bf16.msra.mxu0 %v1443
        %1465 = vmatprep.subr.bf16.mxu0 0
        %1466 = vmatpush1.bf16.msra.mxu0 %v1444
        %1467 = vmatprep.subr.bf16.mxu0 0
        %1468 = vmatpush1.bf16.msra.mxu0 %v1445
        %1469 = vmatprep.subr.bf16.mxu0 0
        %1470 = vmatpush1.bf16.msra.mxu0 %v1446
        %1471 = vmatprep.subr.bf16.mxu0 0
        %1472 = vmatpush1.bf16.msra.mxu0 0
        %1473 = vmatprep.subr.bf16.mxu0 0
        %1474 = vmatpush1.bf16.msra.mxu0 0
        %1475 = vmatprep.subr.bf16.mxu0 0
        %1476 = vmatpush1.bf16.msra.mxu0 0
        %1477 = vmatprep.subr.bf16.mxu0 0
        %1478 = vmatpush1.bf16.msra.mxu0 0
        %1479 = vmatprep.subr.bf16.mxu0 0
        %1480 = vmatpush1.bf16.msra.mxu0 0
        %1481 = vmatprep.subr.bf16.mxu0 0
        %1482 = vmatpush1.bf16.msra.mxu0 0
        %1483 = vmatprep.subr.bf16.mxu0 0
        %1484 = vmatpush1.bf16.msra.mxu0 0
        %1485 = vmatprep.subr.bf16.mxu0 0
        %1486 = vmatpush1.bf16.msra.mxu0 0
        %1487 = vmatprep.mubr.bf16.mxu0 0
        %1488 = vmatmul.mubr.bf16.gmra.mrb[0].mxu0 %v1257
        %v1489 = vpop.f32.mrb[0].mxu0
        %v1490 = vadd.f32 %v1385, %v1489
        %v1491 = vpop.f32.mrb[0].mxu0
        %v1492 = vpop.f32.mrb[0].mxu0
        %v1493 = vadd.f32 %v1388, %v1492
        %v1494 = vpop.f32.mrb[0].mxu0
        %1495 = vmatprep.mubr.bf16.mxu0 0
        %1496 = vmatmul.mubr.bf16.gmra.mrb[0].mxu0 %v1258
        %v1497 = vpop.f32.mrb[0].mxu0
        %v1498 = vadd.f32 %v1393, %v1497
        %v1499 = vpop.f32.mrb[0].mxu0
        %v1500 = vpop.f32.mrb[0].mxu0
        %v1501 = vadd.f32 %v1396, %v1500
        %v1502 = vpop.f32.mrb[0].mxu0
        %1503 = vmatprep.mubr.bf16.mxu0 0
        %1504 = vmatmul.mubr.bf16.gmra.mrb[0].mxu0 %v1259
        %v1505 = vpop.f32.mrb[0].mxu0
        %v1506 = vadd.f32 %v1401, %v1505
        %v1507 = vpop.f32.mrb[0].mxu0
        %v1508 = vpop.f32.mrb[0].mxu0
        %v1509 = vadd.f32 %v1404, %v1508
        %v1510 = vpop.f32.mrb[0].mxu0
        %1511 = vdwg.mxu0
        %v1512 = vld [vmem:[#allocation3 + $0x2] sm:$0xff]
        %v1513 = vld [vmem:[#allocation3 + $0xa] sm:$0xff]
        %v1514 = vld [vmem:[#allocation3 + $0x12] sm:$0xff]
        %v1515 = vld [vmem:[#allocation3 + $0x1a] sm:$0xff]
        %v1516 = vld [vmem:[#allocation3 + $0x22] sm:$0xff]
        %v1517 = vld [vmem:[#allocation3 + $0x2a] sm:$0xf]
        %v1518 = vpack.c.bf16 %v1513, %v1512
        %v1519 = vpack.c.bf16 %v1515, %v1514
        %v1520 = vpack.c.bf16 %v1517, %v1516
        %s1521 = scalar_lea.vmem %s3, 128
        %v1522 = vld [vmem:[%s1521] sm:$0xf]
        %v1523 = vld [vmem:[%s1521 + $0x4] sm:$0xf]
        %v1524 = vld [vmem:[%s1521 + $0x8] sm:$0xf]
        %v1525 = vld [vmem:[%s1521 + $0xc] sm:$0xf]
        %v1526 = vld [vmem:[%s1521 + $0x10] sm:$0xf]
        %v1527 = vld [vmem:[%s1521 + $0x14] sm:$0xf]
        %v1528 = vld [vmem:[%s1521 + $0x18] sm:$0xf]
        %v1529 = vld [vmem:[%s1521 + $0x1c] sm:$0xf]
        %v1530 = vld [vmem:[%s1521 + $0x20] sm:$0xf]
        %v1531 = vld [vmem:[%s1521 + $0x24] sm:$0xf]
        %v1532 = vld [vmem:[%s1521 + $0x28] sm:$0xf]
        %v1533 = vld [vmem:[%s1521 + $0x2c] sm:$0xf]
        %v1534 = vld [vmem:[%s1521 + $0x30] sm:$0xf]
        %v1535 = vld [vmem:[%s1521 + $0x34] sm:$0xf]
        %v1536 = vld [vmem:[%s1521 + $0x38] sm:$0xf]
        %v1537 = vld [vmem:[%s1521 + $0x3c] sm:$0xf]
        %v1554 = vunpack.c.l.b16 %v1522
        %v1555 = vunpack.c.l.b16 %v1523
        %v1556 = vunpack.c.l.b16 %v1524
        %v1557 = vunpack.c.l.b16 %v1525
        %v1558 = vunpack.c.l.b16 %v1526
        %v1559 = vunpack.c.l.b16 %v1527
        %v1560 = vunpack.c.l.b16 %v1528
        %v1561 = vunpack.c.l.b16 %v1529
        %v1562 = vunpack.c.l.b16 %v1530
        %v1563 = vunpack.c.l.b16 %v1531
        %v1564 = vunpack.c.l.b16 %v1532
        %v1565 = vunpack.c.l.b16 %v1533
        %v1566 = vunpack.c.l.b16 %v1534
        %v1567 = vunpack.c.l.b16 %v1535
        %v1568 = vunpack.c.l.b16 %v1536
        %v1569 = vunpack.c.l.b16 %v1537
        %v1570 = vpack.c.b16 %v1555, %v1554
        %v1571 = vpack.c.b16 %v1557, %v1556
        %v1572 = vpack.c.b16 %v1559, %v1558
        %v1573 = vpack.c.b16 %v1561, %v1560
        %v1574 = vpack.c.b16 %v1563, %v1562
        %v1575 = vpack.c.b16 %v1565, %v1564
        %v1576 = vpack.c.b16 %v1567, %v1566
        %v1577 = vpack.c.b16 %v1569, %v1568
        %1586 = vmatprep.subr.bf16.mxu0 0
        %1587 = vmatpush1.bf16.msra.mxu0 %v1570
        %1588 = vmatprep.subr.bf16.mxu0 0
        %1589 = vmatpush1.bf16.msra.mxu0 %v1571
        %1590 = vmatprep.subr.bf16.mxu0 0
        %1591 = vmatpush1.bf16.msra.mxu0 %v1572
        %1592 = vmatprep.subr.bf16.mxu0 0
        %1593 = vmatpush1.bf16.msra.mxu0 %v1573
        %1594 = vmatprep.subr.bf16.mxu0 0
        %1595 = vmatpush1.bf16.msra.mxu0 %v1574
        %1596 = vmatprep.subr.bf16.mxu0 0
        %1597 = vmatpush1.bf16.msra.mxu0 %v1575
        %1598 = vmatprep.subr.bf16.mxu0 0
        %1599 = vmatpush1.bf16.msra.mxu0 %v1576
        %1600 = vmatprep.subr.bf16.mxu0 0
        %1601 = vmatpush1.bf16.msra.mxu0 %v1577
        %1602 = vmatprep.subr.bf16.mxu0 0
        %1603 = vmatpush1.bf16.msra.mxu0 0
        %1604 = vmatprep.subr.bf16.mxu0 0
        %1605 = vmatpush1.bf16.msra.mxu0 0
        %1606 = vmatprep.subr.bf16.mxu0 0
        %1607 = vmatpush1.bf16.msra.mxu0 0
        %1608 = vmatprep.subr.bf16.mxu0 0
        %1609 = vmatpush1.bf16.msra.mxu0 0
        %1610 = vmatprep.subr.bf16.mxu0 0
        %1611 = vmatpush1.bf16.msra.mxu0 0
        %1612 = vmatprep.subr.bf16.mxu0 0
        %1613 = vmatpush1.bf16.msra.mxu0 0
        %1614 = vmatprep.subr.bf16.mxu0 0
        %1615 = vmatpush1.bf16.msra.mxu0 0
        %1616 = vmatprep.subr.bf16.mxu0 0
        %1617 = vmatpush1.bf16.msra.mxu0 0
        %1618 = vmatprep.mubr.bf16.mxu0 0
        %1619 = vmatmul.mubr.bf16.gmra.mrb[0].mxu0 %v1518
        %v1620 = vpop.f32.mrb[0].mxu0
        %v1621 = vadd.f32 0.0, %v1620
        %v1622 = vpop.f32.mrb[0].mxu0
        %v1623 = vpop.f32.mrb[0].mxu0
        %v1624 = vadd.f32 0.0, %v1623
        %v1625 = vpop.f32.mrb[0].mxu0
        %1626 = vmatprep.mubr.bf16.mxu0 0
        %1627 = vmatmul.mubr.bf16.gmra.mrb[0].mxu0 %v1519
        %v1628 = vpop.f32.mrb[0].mxu0
        %v1629 = vadd.f32 0.0, %v1628
        %v1630 = vpop.f32.mrb[0].mxu0
        %v1631 = vpop.f32.mrb[0].mxu0
        %v1632 = vadd.f32 0.0, %v1631
        %v1633 = vpop.f32.mrb[0].mxu0
        %1634 = vmatprep.mubr.bf16.mxu0 0
        %1635 = vmatmul.mubr.bf16.gmra.mrb[0].mxu0 %v1520
        %v1636 = vpop.f32.mrb[0].mxu0
        %v1637 = vadd.f32 0.0, %v1636
        %v1638 = vpop.f32.mrb[0].mxu0
        %v1639 = vpop.f32.mrb[0].mxu0
        %v1640 = vadd.f32 0.0, %v1639
        %v1641 = vpop.f32.mrb[0].mxu0
        %1642 = vdwg.mxu0
        %v1643 = vadd.f32 %v1490, %v1621
        %v1644 = vadd.f32 %v1493, %v1624
        %v1645 = vadd.f32 %v1498, %v1629
        %v1646 = vadd.f32 %v1501, %v1632
        %v1647 = vadd.f32 %v1506, %v1637
        %v1648 = vadd.f32 %v1509, %v1640
        %v1649 = vld [vmem:[#allocation3 + $0x3] sm:$0xff]
        %v1650 = vld [vmem:[#allocation3 + $0xb] sm:$0xff]
        %v1651 = vld [vmem:[#allocation3 + $0x13] sm:$0xff]
        %v1652 = vld [vmem:[#allocation3 + $0x1b] sm:$0xff]
        %v1653 = vld [vmem:[#allocation3 + $0x23] sm:$0xff]
        %v1654 = vld [vmem:[#allocation3 + $0x2b] sm:$0xf]
        %v1655 = vpack.c.bf16 %v1650, %v1649
        %v1656 = vpack.c.bf16 %v1652, %v1651
        %v1657 = vpack.c.bf16 %v1654, %v1653
        %s1658 = scalar_lea.vmem %s3, 192
        %v1659 = vld [vmem:[%s1658] sm:$0xf]
        %v1660 = vld [vmem:[%s1658 + $0x4] sm:$0xf]
        %v1661 = vld [vmem:[%s1658 + $0x8] sm:$0xf]
        %v1662 = vld [vmem:[%s1658 + $0xc] sm:$0xf]
        %v1663 = vld [vmem:[%s1658 + $0x10] sm:$0xf]
        %v1664 = vld [vmem:[%s1658 + $0x14] sm:$0xf]
        %v1665 = vld [vmem:[%s1658 + $0x18] sm:$0xf]
        %v1666 = vld [vmem:[%s1658 + $0x1c] sm:$0xf]
        %v1667 = vld [vmem:[%s1658 + $0x20] sm:$0xf]
        %v1668 = vld [vmem:[%s1658 + $0x24] sm:$0xf]
        %v1669 = vld [vmem:[%s1658 + $0x28] sm:$0xf]
        %v1670 = vld [vmem:[%s1658 + $0x2c] sm:$0xf]
        %v1671 = vld [vmem:[%s1658 + $0x30] sm:$0xf]
        %v1672 = vld [vmem:[%s1658 + $0x34] sm:$0xf]
        %v1673 = vld [vmem:[%s1658 + $0x38] sm:$0xf]
        %v1674 = vld [vmem:[%s1658 + $0x3c] sm:$0xf]
        %v1691 = vunpack.c.l.b16 %v1659
        %v1692 = vunpack.c.l.b16 %v1660
        %v1693 = vunpack.c.l.b16 %v1661
        %v1694 = vunpack.c.l.b16 %v1662
        %v1695 = vunpack.c.l.b16 %v1663
        %v1696 = vunpack.c.l.b16 %v1664
        %v1697 = vunpack.c.l.b16 %v1665
        %v1698 = vunpack.c.l.b16 %v1666
        %v1699 = vunpack.c.l.b16 %v1667
        %v1700 = vunpack.c.l.b16 %v1668
        %v1701 = vunpack.c.l.b16 %v1669
        %v1702 = vunpack.c.l.b16 %v1670
        %v1703 = vunpack.c.l.b16 %v1671
        %v1704 = vunpack.c.l.b16 %v1672
        %v1705 = vunpack.c.l.b16 %v1673
        %v1706 = vunpack.c.l.b16 %v1674
        %v1707 = vpack.c.b16 %v1692, %v1691
        %v1708 = vpack.c.b16 %v1694, %v1693
        %v1709 = vpack.c.b16 %v1696, %v1695
        %v1710 = vpack.c.b16 %v1698, %v1697
        %v1711 = vpack.c.b16 %v1700, %v1699
        %v1712 = vpack.c.b16 %v1702, %v1701
        %v1713 = vpack.c.b16 %v1704, %v1703
        %v1714 = vpack.c.b16 %v1706, %v1705
        %1723 = vmatprep.subr.bf16.mxu0 0
        %1724 = vmatpush1.bf16.msra.mxu0 %v1707
        %1725 = vmatprep.subr.bf16.mxu0 0
        %1726 = vmatpush1.bf16.msra.mxu0 %v1708
        %1727 = vmatprep.subr.bf16.mxu0 0
        %1728 = vmatpush1.bf16.msra.mxu0 %v1709
        %1729 = vmatprep.subr.bf16.mxu0 0
        %1730 = vmatpush1.bf16.msra.mxu0 %v1710
        %1731 = vmatprep.subr.bf16.mxu0 0
        %1732 = vmatpush1.bf16.msra.mxu0 %v1711
        %1733 = vmatprep.subr.bf16.mxu0 0
        %1734 = vmatpush1.bf16.msra.mxu0 %v1712
        %1735 = vmatprep.subr.bf16.mxu0 0
        %1736 = vmatpush1.bf16.msra.mxu0 %v1713
        %1737 = vmatprep.subr.bf16.mxu0 0
        %1738 = vmatpush1.bf16.msra.mxu0 %v1714
        %1739 = vmatprep.subr.bf16.mxu0 0
        %1740 = vmatpush1.bf16.msra.mxu0 0
        %1741 = vmatprep.subr.bf16.mxu0 0
        %1742 = vmatpush1.bf16.msra.mxu0 0
        %1743 = vmatprep.subr.bf16.mxu0 0
        %1744 = vmatpush1.bf16.msra.mxu0 0
        %1745 = vmatprep.subr.bf16.mxu0 0
        %1746 = vmatpush1.bf16.msra.mxu0 0
        %1747 = vmatprep.subr.bf16.mxu0 0
        %1748 = vmatpush1.bf16.msra.mxu0 0
        %1749 = vmatprep.subr.bf16.mxu0 0
        %1750 = vmatpush1.bf16.msra.mxu0 0
        %1751 = vmatprep.subr.bf16.mxu0 0
        %1752 = vmatpush1.bf16.msra.mxu0 0
        %1753 = vmatprep.subr.bf16.mxu0 0
        %1754 = vmatpush1.bf16.msra.mxu0 0
        %1755 = vmatprep.mubr.bf16.mxu0 0
        %1756 = vmatmul.mubr.bf16.gmra.mrb[0].mxu0 %v1655
        %v1757 = vpop.f32.mrb[0].mxu0
        %v1758 = vadd.f32 0.0, %v1757
        %v1759 = vpop.f32.mrb[0].mxu0
        %v1760 = vpop.f32.mrb[0].mxu0
        %v1761 = vadd.f32 0.0, %v1760
        %v1762 = vpop.f32.mrb[0].mxu0
        %1763 = vmatprep.mubr.bf16.mxu0 0
        %1764 = vmatmul.mubr.bf16.gmra.mrb[0].mxu0 %v1656
        %v1765 = vpop.f32.mrb[0].mxu0
        %v1766 = vadd.f32 0.0, %v1765
        %v1767 = vpop.f32.mrb[0].mxu0
        %v1768 = vpop.f32.mrb[0].mxu0
        %v1769 = vadd.f32 0.0, %v1768
        %v1770 = vpop.f32.mrb[0].mxu0
        %1771 = vmatprep.mubr.bf16.mxu0 0
        %1772 = vmatmul.mubr.bf16.gmra.mrb[0].mxu0 %v1657
        %v1773 = vpop.f32.mrb[0].mxu0
        %v1774 = vadd.f32 0.0, %v1773
        %v1775 = vpop.f32.mrb[0].mxu0
        %v1776 = vpop.f32.mrb[0].mxu0
        %v1777 = vadd.f32 0.0, %v1776
        %v1778 = vpop.f32.mrb[0].mxu0
        %1779 = vdwg.mxu0
        %v1780 = vadd.f32 %v1643, %v1758
        %v1781 = vadd.f32 %v1644, %v1761
        %v1782 = vadd.f32 %v1645, %v1766
        %v1783 = vadd.f32 %v1646, %v1769
        %v1784 = vadd.f32 %v1647, %v1774
        %v1785 = vadd.f32 %v1648, %v1777
        %v1786 = vld [vmem:[#allocation3 + $0x4] sm:$0xff]
        %v1787 = vld [vmem:[#allocation3 + $0xc] sm:$0xff]
        %v1788 = vld [vmem:[#allocation3 + $0x14] sm:$0xff]
        %v1789 = vld [vmem:[#allocation3 + $0x1c] sm:$0xff]
        %v1790 = vld [vmem:[#allocation3 + $0x24] sm:$0xff]
        %v1791 = vld [vmem:[#allocation3 + $0x2c] sm:$0xf]
        %v1792 = vpack.c.bf16 %v1787, %v1786
        %v1793 = vpack.c.bf16 %v1789, %v1788
        %v1794 = vpack.c.bf16 %v1791, %v1790
        %s1795 = scalar_lea.vmem %s3, 256
        %v1796 = vld [vmem:[%s1795] sm:$0xf]
        %v1797 = vld [vmem:[%s1795 + $0x4] sm:$0xf]
        %v1798 = vld [vmem:[%s1795 + $0x8] sm:$0xf]
        %v1799 = vld [vmem:[%s1795 + $0xc] sm:$0xf]
        %v1800 = vld [vmem:[%s1795 + $0x10] sm:$0xf]
        %v1801 = vld [vmem:[%s1795 + $0x14] sm:$0xf]
        %v1802 = vld [vmem:[%s1795 + $0x18] sm:$0xf]
        %v1803 = vld [vmem:[%s1795 + $0x1c] sm:$0xf]
        %v1804 = vld [vmem:[%s1795 + $0x20] sm:$0xf]
        %v1805 = vld [vmem:[%s1795 + $0x24] sm:$0xf]
        %v1806 = vld [vmem:[%s1795 + $0x28] sm:$0xf]
        %v1807 = vld [vmem:[%s1795 + $0x2c] sm:$0xf]
        %v1808 = vld [vmem:[%s1795 + $0x30] sm:$0xf]
        %v1809 = vld [vmem:[%s1795 + $0x34] sm:$0xf]
        %v1810 = vld [vmem:[%s1795 + $0x38] sm:$0xf]
        %v1811 = vld [vmem:[%s1795 + $0x3c] sm:$0xf]
        %v1828 = vunpack.c.l.b16 %v1796
        %v1829 = vunpack.c.l.b16 %v1797
        %v1830 = vunpack.c.l.b16 %v1798
        %v1831 = vunpack.c.l.b16 %v1799
        %v1832 = vunpack.c.l.b16 %v1800
        %v1833 = vunpack.c.l.b16 %v1801
        %v1834 = vunpack.c.l.b16 %v1802
        %v1835 = vunpack.c.l.b16 %v1803
        %v1836 = vunpack.c.l.b16 %v1804
        %v1837 = vunpack.c.l.b16 %v1805
        %v1838 = vunpack.c.l.b16 %v1806
        %v1839 = vunpack.c.l.b16 %v1807
        %v1840 = vunpack.c.l.b16 %v1808
        %v1841 = vunpack.c.l.b16 %v1809
        %v1842 = vunpack.c.l.b16 %v1810
        %v1843 = vunpack.c.l.b16 %v1811
        %v1844 = vpack.c.b16 %v1829, %v1828
        %v1845 = vpack.c.b16 %v1831, %v1830
        %v1846 = vpack.c.b16 %v1833, %v1832
        %v1847 = vpack.c.b16 %v1835, %v1834
        %v1848 = vpack.c.b16 %v1837, %v1836
        %v1849 = vpack.c.b16 %v1839, %v1838
        %v1850 = vpack.c.b16 %v1841, %v1840
        %v1851 = vpack.c.b16 %v1843, %v1842
        %1860 = vmatprep.subr.bf16.mxu0 0
        %1861 = vmatpush1.bf16.msra.mxu0 %v1844
        %1862 = vmatprep.subr.bf16.mxu0 0
        %1863 = vmatpush1.bf16.msra.mxu0 %v1845
        %1864 = vmatprep.subr.bf16.mxu0 0
        %1865 = vmatpush1.bf16.msra.mxu0 %v1846
        %1866 = vmatprep.subr.bf16.mxu0 0
        %1867 = vmatpush1.bf16.msra.mxu0 %v1847
        %1868 = vmatprep.subr.bf16.mxu0 0
        %1869 = vmatpush1.bf16.msra.mxu0 %v1848
        %1870 = vmatprep.subr.bf16.mxu0 0
        %1871 = vmatpush1.bf16.msra.mxu0 %v1849
        %1872 = vmatprep.subr.bf16.mxu0 0
        %1873 = vmatpush1.bf16.msra.mxu0 %v1850
        %1874 = vmatprep.subr.bf16.mxu0 0
        %1875 = vmatpush1.bf16.msra.mxu0 %v1851
        %1876 = vmatprep.subr.bf16.mxu0 0
        %1877 = vmatpush1.bf16.msra.mxu0 0
        %1878 = vmatprep.subr.bf16.mxu0 0
        %1879 = vmatpush1.bf16.msra.mxu0 0
        %1880 = vmatprep.subr.bf16.mxu0 0
        %1881 = vmatpush1.bf16.msra.mxu0 0
        %1882 = vmatprep.subr.bf16.mxu0 0
        %1883 = vmatpush1.bf16.msra.mxu0 0
        %1884 = vmatprep.subr.bf16.mxu0 0
        %1885 = vmatpush1.bf16.msra.mxu0 0
        %1886 = vmatprep.subr.bf16.mxu0 0
        %1887 = vmatpush1.bf16.msra.mxu0 0
        %1888 = vmatprep.subr.bf16.mxu0 0
        %1889 = vmatpush1.bf16.msra.mxu0 0
        %1890 = vmatprep.subr.bf16.mxu0 0
        %1891 = vmatpush1.bf16.msra.mxu0 0
        %1892 = vmatprep.mubr.bf16.mxu0 0
        %1893 = vmatmul.mubr.bf16.gmra.mrb[0].mxu0 %v1792
        %v1894 = vpop.f32.mrb[0].mxu0
        %v1895 = vadd.f32 0.0, %v1894
        %v1896 = vpop.f32.mrb[0].mxu0
        %v1897 = vpop.f32.mrb[0].mxu0
        %v1898 = vadd.f32 0.0, %v1897
        %v1899 = vpop.f32.mrb[0].mxu0
        %1900 = vmatprep.mubr.bf16.mxu0 0
        %1901 = vmatmul.mubr.bf16.gmra.mrb[0].mxu0 %v1793
        %v1902 = vpop.f32.mrb[0].mxu0
        %v1903 = vadd.f32 0.0, %v1902
        %v1904 = vpop.f32.mrb[0].mxu0
        %v1905 = vpop.f32.mrb[0].mxu0
        %v1906 = vadd.f32 0.0, %v1905
        %v1907 = vpop.f32.mrb[0].mxu0
        %1908 = vmatprep.mubr.bf16.mxu0 0
        %1909 = vmatmul.mubr.bf16.gmra.mrb[0].mxu0 %v1794
        %v1910 = vpop.f32.mrb[0].mxu0
        %v1911 = vadd.f32 0.0, %v1910
        %v1912 = vpop.f32.mrb[0].mxu0
        %v1913 = vpop.f32.mrb[0].mxu0
        %v1914 = vadd.f32 0.0, %v1913
        %v1915 = vpop.f32.mrb[0].mxu0
        %1916 = vdwg.mxu0
        %v1917 = vadd.f32 %v1780, %v1895
        %v1918 = vadd.f32 %v1781, %v1898
        %v1919 = vadd.f32 %v1782, %v1903
        %v1920 = vadd.f32 %v1783, %v1906
        %v1921 = vadd.f32 %v1784, %v1911
        %v1922 = vadd.f32 %v1785, %v1914
        %v1923 = vld [vmem:[%s4] sm:$0x1]
        %v1925 = vlaneseq
        %v1926 = vshrl.u32 %v1925, 7
        %v1927 = vsub.s32 0, %v1926
        %v1928 = vrot.slane %v1923, %v1927
        %v1930 = vadd.f32 %v1917, %v1928
        %v1931 = vadd.f32 %v1918, %v1928
        %v1932 = vadd.f32 %v1919, %v1928
        %v1933 = vadd.f32 %v1920, %v1928
        %v1934 = vadd.f32 %v1921, %v1928
        %v1935 = vadd.f32 %v1922, %v1928
        %v1936 = vmax.f32 %v1930, 0.0
        %v1937 = vmax.f32 %v1931, 0.0
        %v1938 = vmax.f32 %v1932, 0.0
        %v1939 = vmax.f32 %v1933, 0.0
        %v1940 = vmax.f32 %v1934, 0.0
        %v1941 = vmax.f32 %v1935, 0.0
        %1948 = vrot.lane.b32.xlu0 %v1936, 64
        %v1949 = vpop.permute.xlu0 %1948
        %1950 = vrot.lane.b32.xlu0 %v1937, 64
        %v1951 = vpop.permute.xlu0 %1950
        %1952 = vrot.lane.b32.xlu0 %v1938, 64
        %v1953 = vpop.permute.xlu0 %1952
        %1954 = vrot.lane.b32.xlu0 %v1939, 64
        %v1955 = vpop.permute.xlu0 %1954
        %1956 = vrot.lane.b32.xlu0 %v1940, 64
        %v1957 = vpop.permute.xlu0 %1956
        %1958 = vrot.lane.b32.xlu0 %v1941, 64
        %v1959 = vpop.permute.xlu0 %1958
        %v1966 = vmax.f32 %v1936, %v1949
        %v1967 = vmax.f32 %v1937, %v1951
        %v1968 = vmax.f32 %v1938, %v1953
        %v1969 = vmax.f32 %v1939, %v1955
        %v1970 = vmax.f32 %v1940, %v1957
        %v1971 = vmax.f32 %v1941, %v1959
        %1972 = vst.msk [vmem:[#allocation4] sm:$0xff] %vm365, %v1966
        %1973 = vst.msk [vmem:[#allocation4 + $0x8] sm:$0xff] %vm365, %v1967
        %1974 = vst.msk [vmem:[#allocation4 + $0x10] sm:$0xff] %vm365, %v1968
        %1975 = vst.msk [vmem:[#allocation4 + $0x18] sm:$0xff] %vm365, %v1969
        %1976 = vst.msk [vmem:[#allocation4 + $0x20] sm:$0xff] %vm365, %v1970
        %vm1977 = vcmask 519168
        %1978 = vst.msk [vmem:[#allocation4 + $0x28] sm:$0xf] %vm1977, %v1971
        %v1979 = vld [vmem:[#allocation4] ss:$12 sm:$0xf]
        %s1980 = scalar_lea.vmem [#allocation4], 1
        %v1981 = vld [vmem:[%s1980] ss:$12 sm:$0xf]
        %v1982 = vmax.f32 %v1979, %v1981
        %v1983 = vpack.c.bf16 %v1982, %v1982
        %v1984 = vld [vmem:[%s5] sm:$0xf]
        %v1985 = vld [vmem:[%s5 + $0x4] sm:$0xf]
        %v1986 = vld [vmem:[%s5 + $0x8] sm:$0xf]
        %v1987 = vld [vmem:[%s5 + $0xc] sm:$0xf]
        %v1988 = vld [vmem:[%s5 + $0x10] sm:$0xf]
        %v1989 = vld [vmem:[%s5 + $0x14] sm:$0xf]
        %v1990 = vld [vmem:[%s5 + $0x18] sm:$0xf]
        %v1991 = vld [vmem:[%s5 + $0x1c] sm:$0xf]
        %s1992 = scalar_lea.vmem [#allocation4], 2
        %v1993 = vld [vmem:[%s1992] ss:$12 sm:$0xf]
        %s1994 = scalar_lea.vmem [#allocation4], 3
        %v1995 = vld [vmem:[%s1994] ss:$12 sm:$0xf]
        %v1996 = vmax.f32 %v1993, %v1995
        %v1997 = vpack.c.bf16 %v1996, %v1996
        %s1998 = scalar_lea.vmem %s5, 32
        %v1999 = vld [vmem:[%s1998] sm:$0xf]
        %v2000 = vld [vmem:[%s1998 + $0x4] sm:$0xf]
        %v2001 = vld [vmem:[%s1998 + $0x8] sm:$0xf]
        %v2002 = vld [vmem:[%s1998 + $0xc] sm:$0xf]
        %v2003 = vld [vmem:[%s1998 + $0x10] sm:$0xf]
        %v2004 = vld [vmem:[%s1998 + $0x14] sm:$0xf]
        %v2005 = vld [vmem:[%s1998 + $0x18] sm:$0xf]
        %v2006 = vld [vmem:[%s1998 + $0x1c] sm:$0xf]
        %v2015 = vunpack.c.l.b16 %v1999
        %v2016 = vunpack.c.l.b16 %v2000
        %v2017 = vunpack.c.l.b16 %v2001
        %v2018 = vunpack.c.l.b16 %v2002
        %v2019 = vunpack.c.l.b16 %v2003
        %v2020 = vunpack.c.l.b16 %v2004
        %v2021 = vunpack.c.l.b16 %v2005
        %v2022 = vunpack.c.l.b16 %v2006
        %v2023 = vpack.c.b16 %v2016, %v2015
        %v2024 = vpack.c.b16 %v2018, %v2017
        %v2025 = vpack.c.b16 %v2020, %v2019
        %v2026 = vpack.c.b16 %v2022, %v2021
        %v2032 = vsel %vm365, %v1997, 0
        %2034 = vmatprep.subr.bf16.mxu0 0
        %2035 = vmatpush1.bf16.msra.mxu0 %v2023
        %2036 = vmatprep.subr.bf16.mxu0 0
        %2037 = vmatpush1.bf16.msra.mxu0 %v2024
        %2038 = vmatprep.subr.bf16.mxu0 0
        %2039 = vmatpush1.bf16.msra.mxu0 %v2025
        %2040 = vmatprep.subr.bf16.mxu0 0
        %2041 = vmatpush1.bf16.msra.mxu0 %v2026
        %2042 = vmatprep.subr.bf16.mxu0 0
        %2043 = vmatpush1.bf16.msra.mxu0 0
        %2044 = vmatprep.subr.bf16.mxu0 0
        %2045 = vmatpush1.bf16.msra.mxu0 0
        %2046 = vmatprep.subr.bf16.mxu0 0
        %2047 = vmatpush1.bf16.msra.mxu0 0
        %2048 = vmatprep.subr.bf16.mxu0 0
        %2049 = vmatpush1.bf16.msra.mxu0 0
        %2050 = vmatprep.subr.bf16.mxu0 0
        %2051 = vmatpush1.bf16.msra.mxu0 0
        %2052 = vmatprep.subr.bf16.mxu0 0
        %2053 = vmatpush1.bf16.msra.mxu0 0
        %2054 = vmatprep.subr.bf16.mxu0 0
        %2055 = vmatpush1.bf16.msra.mxu0 0
        %2056 = vmatprep.subr.bf16.mxu0 0
        %2057 = vmatpush1.bf16.msra.mxu0 0
        %2058 = vmatprep.subr.bf16.mxu0 0
        %2059 = vmatpush1.bf16.msra.mxu0 0
        %2060 = vmatprep.subr.bf16.mxu0 0
        %2061 = vmatpush1.bf16.msra.mxu0 0
        %2062 = vmatprep.subr.bf16.mxu0 0
        %2063 = vmatpush1.bf16.msra.mxu0 0
        %2064 = vmatprep.subr.bf16.mxu0 0
        %2065 = vmatpush1.bf16.msra.mxu0 0
        %2066 = vmatprep.mubr.bf16.mxu0 0
        %2067 = vmatmul.mubr.bf16.gmra.mrb[0].mxu0 %v2032
        %v2068 = vpop.f32.mrb[0].mxu0
        %v2069 = vadd.f32 0.0, %v2068
        %v2070 = vpop.f32.mrb[0].mxu0
        %v2071 = vpop.f32.mrb[0].mxu0
        %v2072 = vpop.f32.mrb[0].mxu0
        %2073 = vdwg.mxu0
        %v2082 = vunpack.c.l.b16 %v1984
        %v2083 = vunpack.c.l.b16 %v1985
        %v2084 = vunpack.c.l.b16 %v1986
        %v2085 = vunpack.c.l.b16 %v1987
        %v2086 = vunpack.c.l.b16 %v1988
        %v2087 = vunpack.c.l.b16 %v1989
        %v2088 = vunpack.c.l.b16 %v1990
        %v2089 = vunpack.c.l.b16 %v1991
        %v2090 = vpack.c.b16 %v2083, %v2082
        %v2091 = vpack.c.b16 %v2085, %v2084
        %v2092 = vpack.c.b16 %v2087, %v2086
        %v2093 = vpack.c.b16 %v2089, %v2088
        %v2099 = vsel %vm365, %v1983, 0
        %2101 = vmatprep.subr.bf16.mxu0 0
        %2102 = vmatpush1.bf16.msra.mxu0 %v2090
        %2103 = vmatprep.subr.bf16.mxu0 0
        %2104 = vmatpush1.bf16.msra.mxu0 %v2091
        %2105 = vmatprep.subr.bf16.mxu0 0
        %2106 = vmatpush1.bf16.msra.mxu0 %v2092
        %2107 = vmatprep.subr.bf16.mxu0 0
        %2108 = vmatpush1.bf16.msra.mxu0 %v2093
        %2109 = vmatprep.subr.bf16.mxu0 0
        %2110 = vmatpush1.bf16.msra.mxu0 0
        %2111 = vmatprep.subr.bf16.mxu0 0
        %2112 = vmatpush1.bf16.msra.mxu0 0
        %2113 = vmatprep.subr.bf16.mxu0 0
        %2114 = vmatpush1.bf16.msra.mxu0 0
        %2115 = vmatprep.subr.bf16.mxu0 0
        %2116 = vmatpush1.bf16.msra.mxu0 0
        %2117 = vmatprep.subr.bf16.mxu0 0
        %2118 = vmatpush1.bf16.msra.mxu0 0
        %2119 = vmatprep.subr.bf16.mxu0 0
        %2120 = vmatpush1.bf16.msra.mxu0 0
        %2121 = vmatprep.subr.bf16.mxu0 0
        %2122 = vmatpush1.bf16.msra.mxu0 0
        %2123 = vmatprep.subr.bf16.mxu0 0
        %2124 = vmatpush1.bf16.msra.mxu0 0
        %2125 = vmatprep.subr.bf16.mxu0 0
        %2126 = vmatpush1.bf16.msra.mxu0 0
        %2127 = vmatprep.subr.bf16.mxu0 0
        %2128 = vmatpush1.bf16.msra.mxu0 0
        %2129 = vmatprep.subr.bf16.mxu0 0
        %2130 = vmatpush1.bf16.msra.mxu0 0
        %2131 = vmatprep.subr.bf16.mxu0 0
        %2132 = vmatpush1.bf16.msra.mxu0 0
        %2133 = vmatprep.mubr.bf16.mxu0 0
        %2134 = vmatmul.mubr.bf16.gmra.mrb[0].mxu0 %v2099
        %v2135 = vpop.f32.mrb[0].mxu0
        %v2136 = vadd.f32 %v2069, %v2135
        %v2137 = vpop.f32.mrb[0].mxu0
        %v2138 = vpop.f32.mrb[0].mxu0
        %v2139 = vpop.f32.mrb[0].mxu0
        %2140 = vdwg.mxu0
        %s2141 = scalar_lea.vmem [#allocation4], 4
        %v2142 = vld [vmem:[%s2141] ss:$12 sm:$0xf]
        %s2143 = scalar_lea.vmem [#allocation4], 5
        %v2144 = vld [vmem:[%s2143] ss:$12 sm:$0xf]
        %v2145 = vmax.f32 %v2142, %v2144
        %v2146 = vpack.c.bf16 %v2145, %v2145
        %s2147 = scalar_lea.vmem %s5, 64
        %v2148 = vld [vmem:[%s2147] sm:$0xf]
        %v2149 = vld [vmem:[%s2147 + $0x4] sm:$0xf]
        %v2150 = vld [vmem:[%s2147 + $0x8] sm:$0xf]
        %v2151 = vld [vmem:[%s2147 + $0xc] sm:$0xf]
        %v2152 = vld [vmem:[%s2147 + $0x10] sm:$0xf]
        %v2153 = vld [vmem:[%s2147 + $0x14] sm:$0xf]
        %v2154 = vld [vmem:[%s2147 + $0x18] sm:$0xf]
        %v2155 = vld [vmem:[%s2147 + $0x1c] sm:$0xf]
        %v2164 = vunpack.c.l.b16 %v2148
        %v2165 = vunpack.c.l.b16 %v2149
        %v2166 = vunpack.c.l.b16 %v2150
        %v2167 = vunpack.c.l.b16 %v2151
        %v2168 = vunpack.c.l.b16 %v2152
        %v2169 = vunpack.c.l.b16 %v2153
        %v2170 = vunpack.c.l.b16 %v2154
        %v2171 = vunpack.c.l.b16 %v2155
        %v2172 = vpack.c.b16 %v2165, %v2164
        %v2173 = vpack.c.b16 %v2167, %v2166
        %v2174 = vpack.c.b16 %v2169, %v2168
        %v2175 = vpack.c.b16 %v2171, %v2170
        %v2181 = vsel %vm365, %v2146, 0
        %2183 = vmatprep.subr.bf16.mxu0 0
        %2184 = vmatpush1.bf16.msra.mxu0 %v2172
        %2185 = vmatprep.subr.bf16.mxu0 0
        %2186 = vmatpush1.bf16.msra.mxu0 %v2173
        %2187 = vmatprep.subr.bf16.mxu0 0
        %2188 = vmatpush1.bf16.msra.mxu0 %v2174
        %2189 = vmatprep.subr.bf16.mxu0 0
        %2190 = vmatpush1.bf16.msra.mxu0 %v2175
        %2191 = vmatprep.subr.bf16.mxu0 0
        %2192 = vmatpush1.bf16.msra.mxu0 0
        %2193 = vmatprep.subr.bf16.mxu0 0
        %2194 = vmatpush1.bf16.msra.mxu0 0
        %2195 = vmatprep.subr.bf16.mxu0 0
        %2196 = vmatpush1.bf16.msra.mxu0 0
        %2197 = vmatprep.subr.bf16.mxu0 0
        %2198 = vmatpush1.bf16.msra.mxu0 0
        %2199 = vmatprep.subr.bf16.mxu0 0
        %2200 = vmatpush1.bf16.msra.mxu0 0
        %2201 = vmatprep.subr.bf16.mxu0 0
        %2202 = vmatpush1.bf16.msra.mxu0 0
        %2203 = vmatprep.subr.bf16.mxu0 0
        %2204 = vmatpush1.bf16.msra.mxu0 0
        %2205 = vmatprep.subr.bf16.mxu0 0
        %2206 = vmatpush1.bf16.msra.mxu0 0
        %2207 = vmatprep.subr.bf16.mxu0 0
        %2208 = vmatpush1.bf16.msra.mxu0 0
        %2209 = vmatprep.subr.bf16.mxu0 0
        %2210 = vmatpush1.bf16.msra.mxu0 0
        %2211 = vmatprep.subr.bf16.mxu0 0
        %2212 = vmatpush1.bf16.msra.mxu0 0
        %2213 = vmatprep.subr.bf16.mxu0 0
        %2214 = vmatpush1.bf16.msra.mxu0 0
        %2215 = vmatprep.mubr.bf16.mxu0 0
        %2216 = vmatmul.mubr.bf16.gmra.mrb[0].mxu0 %v2181
        %v2217 = vpop.f32.mrb[0].mxu0
        %v2218 = vadd.f32 0.0, %v2217
        %v2219 = vpop.f32.mrb[0].mxu0
        %v2220 = vpop.f32.mrb[0].mxu0
        %v2221 = vpop.f32.mrb[0].mxu0
        %2222 = vdwg.mxu0
        %v2223 = vadd.f32 %v2136, %v2218
        %s2224 = scalar_lea.vmem [#allocation4], 6
        %v2225 = vld [vmem:[%s2224] ss:$12 sm:$0xf]
        %s2226 = scalar_lea.vmem [#allocation4], 7
        %v2227 = vld [vmem:[%s2226] ss:$12 sm:$0xf]
        %v2228 = vmax.f32 %v2225, %v2227
        %v2229 = vpack.c.bf16 %v2228, %v2228
        %s2230 = scalar_lea.vmem %s5, 96
        %v2231 = vld [vmem:[%s2230] sm:$0xf]
        %v2232 = vld [vmem:[%s2230 + $0x4] sm:$0xf]
        %v2233 = vld [vmem:[%s2230 + $0x8] sm:$0xf]
        %v2234 = vld [vmem:[%s2230 + $0xc] sm:$0xf]
        %v2235 = vld [vmem:[%s2230 + $0x10] sm:$0xf]
        %v2236 = vld [vmem:[%s2230 + $0x14] sm:$0xf]
        %v2237 = vld [vmem:[%s2230 + $0x18] sm:$0xf]
        %v2238 = vld [vmem:[%s2230 + $0x1c] sm:$0xf]
        %v2247 = vunpack.c.l.b16 %v2231
        %v2248 = vunpack.c.l.b16 %v2232
        %v2249 = vunpack.c.l.b16 %v2233
        %v2250 = vunpack.c.l.b16 %v2234
        %v2251 = vunpack.c.l.b16 %v2235
        %v2252 = vunpack.c.l.b16 %v2236
        %v2253 = vunpack.c.l.b16 %v2237
        %v2254 = vunpack.c.l.b16 %v2238
        %v2255 = vpack.c.b16 %v2248, %v2247
        %v2256 = vpack.c.b16 %v2250, %v2249
        %v2257 = vpack.c.b16 %v2252, %v2251
        %v2258 = vpack.c.b16 %v2254, %v2253
        %v2264 = vsel %vm365, %v2229, 0
        %2266 = vmatprep.subr.bf16.mxu0 0
        %2267 = vmatpush1.bf16.msra.mxu0 %v2255
        %2268 = vmatprep.subr.bf16.mxu0 0
        %2269 = vmatpush1.bf16.msra.mxu0 %v2256
        %2270 = vmatprep.subr.bf16.mxu0 0
        %2271 = vmatpush1.bf16.msra.mxu0 %v2257
        %2272 = vmatprep.subr.bf16.mxu0 0
        %2273 = vmatpush1.bf16.msra.mxu0 %v2258
        %2274 = vmatprep.subr.bf16.mxu0 0
        %2275 = vmatpush1.bf16.msra.mxu0 0
        %2276 = vmatprep.subr.bf16.mxu0 0
        %2277 = vmatpush1.bf16.msra.mxu0 0
        %2278 = vmatprep.subr.bf16.mxu0 0
        %2279 = vmatpush1.bf16.msra.mxu0 0
        %2280 = vmatprep.subr.bf16.mxu0 0
        %2281 = vmatpush1.bf16.msra.mxu0 0
        %2282 = vmatprep.subr.bf16.mxu0 0
        %2283 = vmatpush1.bf16.msra.mxu0 0
        %2284 = vmatprep.subr.bf16.mxu0 0
        %2285 = vmatpush1.bf16.msra.mxu0 0
        %2286 = vmatprep.subr.bf16.mxu0 0
        %2287 = vmatpush1.bf16.msra.mxu0 0
        %2288 = vmatprep.subr.bf16.mxu0 0
        %2289 = vmatpush1.bf16.msra.mxu0 0
        %2290 = vmatprep.subr.bf16.mxu0 0
        %2291 = vmatpush1.bf16.msra.mxu0 0
        %2292 = vmatprep.subr.bf16.mxu0 0
        %2293 = vmatpush1.bf16.msra.mxu0 0
        %2294 = vmatprep.subr.bf16.mxu0 0
        %2295 = vmatpush1.bf16.msra.mxu0 0
        %2296 = vmatprep.subr.bf16.mxu0 0
        %2297 = vmatpush1.bf16.msra.mxu0 0
        %2298 = vmatprep.mubr.bf16.mxu0 0
        %2299 = vmatmul.mubr.bf16.gmra.mrb[0].mxu0 %v2264
        %v2300 = vpop.f32.mrb[0].mxu0
        %v2301 = vadd.f32 0.0, %v2300
        %v2302 = vpop.f32.mrb[0].mxu0
        %v2303 = vpop.f32.mrb[0].mxu0
        %v2304 = vpop.f32.mrb[0].mxu0
        %2305 = vdwg.mxu0
        %v2306 = vadd.f32 %v2223, %v2301
        %v2307 = vld [vmem:[%s6] sm:$0x1]
        %v2309 = vlaneseq
        %v2310 = vshrl.u32 %v2309, 7
        %v2311 = vsub.s32 0, %v2310
        %v2312 = vrot.slane %v2307, %v2311
        %v2314 = vadd.f32 %v2306, %v2312
        %2315 = vst [vmem:[%s271] sm:$0xf] %v2314
        %s2316 = sand.u32 %s181, 1
        %s2317 = scalar_lea.sflag [#allocation6], %s2316
        %s2318 = sand.u32 %s181, 1
        %s2319 = smul.addr %s2318, 4
        %s2320 = scalar_lea.vmem [#allocation5], %s2319
        // Predicated region
        $region49: #{forward.1} parent=47 // pred_check
          %p2321 = pneg %p191
        $region50: #{forward.1} parent=47 // pred_check_branch
          %2323 = sbr.rel (%p2321) target = $region52
        $region51: #{forward.1} parent=47 // pred_region
          %s2325 = ssub.s32 64, 64
          %2326 = vsyncadd %s2317, %s2325
          %s2327 = smul.addr %s21, 64
          %s2328 = scalar_lea.hbm %s7, %s2327
          %s2330 = sshll.u32 %s2320, 4
          %s2331 = int_to_ptr.vmem [resolvable:$true] %s2330
          %2333 = dma.vmem_to_hbm [thread:$0]  %s2331, 64, %s2328, %s2317
        $region52: #{forward.1} parent=47 // pred_fallthru
          _
      $region48: #{forward.1} parent=5 // pred_fallthru
        _
      %p2334 = scmp.le.s32.totalorder 2, %s16
      // Predicated region
      $region53: #{forward.1} parent=5 // pred_check
        %p2335 = pneg %p2334
      $region54: #{forward.1} parent=5 // pred_check_branch
        %2337 = sbr.rel (%p2335) target = $region56
      $region55: #{forward.1} parent=5 // pred_region
        %s2338 = ssub.s32 %s16, 2
        // Predicated region
        $region57: #{forward.1} parent=55 // pred_check
          %p2339 = pneg %p197
        $region58: #{forward.1} parent=55 // pred_check_branch
          %2341 = sbr.rel (%p2339) target = $region60
        $region59: #{forward.1} parent=55 // pred_region
          %s2342 = sand.u32 %s182, 1
          %s2343 = scalar_lea.sflag [#allocation6], %s2342
          %s2344 = sand.u32 %s182, 1
          %s2345 = smul.addr %s2344, 4
          %s2346 = scalar_lea.vmem [#allocation5], %s2345
          %2347 = dma.done %s2343, 64
        $region60: #{forward.1} parent=55 // pred_fallthru
          _
      $region56: #{forward.1} parent=5 // pred_fallthru
        _
    $region6: #{forward.1} parent=1 // loop_footer
      %s20 = sadd.s32 1, %s16
    $region7: #{forward.1} parent=1 // loop_footer_branch
      %15 = sbr.rel target = $region3
    $region8: #{forward.1} parent=1 // loop_exit
      _
    %2348 = vsyncpa [#allocation6], 1
    %s2349 = scalar_lea.sflag [#allocation6], 1
    %2350 = vsyncpa %s2349, 1

</llo_original>
